<compile_context>
chip_gen: v7x
topology: tpu7x:2x2x1
jax: 0.10.0
libtpu: 0.0.40
codegen_flags: <defaults>
</compile_context>

<pallas_src>
import functools

import jax
import jax.numpy as jnp
from jax.experimental import pallas as pl
from jax.experimental.pallas import tpu as pltpu


_TOPK_MAX = 128 * 1024  # use exact lax.top_k for the order statistic up to here


# ----------------------------------------------------------------------------
# Pallas kernels
# ----------------------------------------------------------------------------
def _ohem_pixel_kernel(score_ref, tgt_ref, loss_ref, pred_ref, *,
                       ignore_label, hw, tm):
    # score_ref: (C, TM) logits block (f32 or bf16), pixels on the lane axis
    # tgt_ref:   (1, TM) int32 labels
    # loss_ref:  (1, TM) f32 per-pixel CE loss            (0.0 where ignored)
    # pred_ref:  (1, TM) f32 softmax prob of target class (2.0 where ignored,
    #                     so those pixels sort last and are never kept)
    s = score_ref[...].astype(jnp.float32)
    tgt = tgt_ref[...]

    # Mask pixels past the real H*W extent (partial trailing block).
    i = pl.program_id(1)
    lane = jax.lax.broadcasted_iota(jnp.int32, (1, tm), 1)
    pix_ok = (i * tm + lane) < hw
    valid = (tgt != ignore_label) & pix_ok
    t = jnp.where(valid, tgt, 0)                       # clamp ignore -> class 0

    m = jnp.max(s, axis=0, keepdims=True)              # (1, TM)
    lse = m + jnp.log(jnp.sum(jnp.exp(s - m), axis=0, keepdims=True))

    cls = jax.lax.broadcasted_iota(jnp.int32, s.shape, 0)
    onehot = (cls == t).astype(jnp.float32)
    s_t = jnp.sum(s * onehot, axis=0, keepdims=True)   # logit of target class

    loss_ref[...] = jnp.where(valid, lse - s_t, 0.0)
    pred_ref[...] = jnp.where(valid, jnp.exp(s_t - lse), 2.0)


def _ohem_keep_kernel(thr_ref, loss_ref, pred_ref, sum_ref, cnt_ref,
                      acc_sum, acc_cnt, *, tm, total):
    # thr_ref: (1, 1) f32 OHEM threshold (SMEM scalar)
    # loss_ref, pred_ref: (1, TM) blocks of per-pixel loss / target-class prob
    # sum_ref, cnt_ref:   (1, 128) per-split outputs (value in lane 0)
    # acc_sum, acc_cnt:   (1, TM) f32 VMEM accumulators (per grid-split)
    p = pl.program_id(0)
    i = pl.program_id(1)

    @pl.when(i == 0)
    def _():
        acc_sum[...] = jnp.zeros_like(acc_sum)
        acc_cnt[...] = jnp.zeros_like(acc_cnt)

    blk = p * pl.num_programs(1) + i
    lane = jax.lax.broadcasted_iota(jnp.int32, (1, tm), 1)
    in_range = (blk * tm + lane) < total
    keep = in_range & (pred_ref[...] < thr_ref[0, 0])
    acc_sum[...] += jnp.where(keep, loss_ref[...], 0.0)
    acc_cnt[...] += jnp.where(keep, 1.0, 0.0)

    @pl.when(i == pl.num_programs(1) - 1)
    def _():
        out_lane = jax.lax.broadcasted_iota(jnp.int32, (1, 128), 1)
        s = jnp.sum(acc_sum[...], axis=1, keepdims=True)
        c = jnp.sum(acc_cnt[...], axis=1, keepdims=True)
        sum_ref[...] = jnp.where(out_lane == 0, s, 0.0)
        cnt_ref[...] = jnp.where(out_lane == 0, c, 0.0)


# ----------------------------------------------------------------------------
# Plain-JAX glue
# ----------------------------------------------------------------------------
def _round_up(x, m):
    return ((x + m - 1) // m) * m


def _pick_pixel_tile(c, hw, itemsize):
    """Pixel tile: ~1.5 MiB of logits per block (double-buffered by the
    pipeline), capped at 8192 lanes so in-kernel f32 intermediates stay well
    inside v7x's 64 MiB physical VMEM, floored at 512 lanes."""
    budget = 1536 * 1024
    tm = budget // max(1, c * itemsize)
    tm = max(512, min(tm, 8192))
    tm = (tm // 128) * 128
    tm = min(tm, _round_up(hw, 128))
    return max(tm, 128)


def _resize_bilinear_align_corners(x, out_h, out_w):
    """F.interpolate(x, (out_h, out_w), mode='bilinear', align_corners=True), NCHW."""
    n, c, h, w = x.shape
    if (h, w) == (out_h, out_w):
        return x

    def coords(in_size, out_size):
        if out_size == 1:
            return jnp.zeros((1,), jnp.float32)
        return jnp.arange(out_size, dtype=jnp.float32) * ((in_size - 1) / (out_size - 1))

    yc, xc = coords(h, out_h), coords(w, out_w)
    y0 = jnp.floor(yc).astype(jnp.int32)
    y1 = jnp.minimum(y0 + 1, h - 1)
    x0 = jnp.floor(xc).astype(jnp.int32)
    x1 = jnp.minimum(x0 + 1, w - 1)
    wy = (yc - y0.astype(jnp.float32))[None, None, :, None]
    wx = (xc - x0.astype(jnp.float32))[None, None, None, :]
    top, bot = x[:, :, y0, :], x[:, :, y1, :]
    row = top * (1.0 - wy) + bot * wy
    return row[:, :, :, x0] * (1.0 - wx) + row[:, :, :, x1] * wx


# ----------------------------------------------------------------------------
# Forward pass (matches OhemCrossEntropy.forward with weight=None)
# ----------------------------------------------------------------------------
def ohem_cross_entropy(score, target, *, ignore_label=255, thres=0.7,
                       min_kept=100000, tile_pixels=None):
    """score: (N, C, PH, PW) float logits, target: (N, H, W) int labels."""
    min_kept = max(1, min_kept)
    n, c, ph, pw = score.shape
    _, h, w = target.shape
    if (ph, pw) != (h, w):
        # TODO(synk): fuse the align_corners=True bilinear upsample into the
        # pixel kernel (scalar-prefetch the y0/y1 source rows + lerp in VMEM)
        # instead of materializing the full-resolution f32 logits here.
        score = _resize_bilinear_align_corners(score.astype(jnp.float32), h, w)
    if score.dtype not in (jnp.dtype(jnp.float32), jnp.dtype(jnp.bfloat16)):
        score = score.astype(jnp.float32)

    hw = h * w
    # Free contiguous collapses -- no transpose, no padding of the big tensor.
    score3 = score.reshape(n, c, hw)                       # (N, C, HW)
    tgt3 = target.reshape(n, 1, hw).astype(jnp.int32)      # (N, 1, HW)

    itemsize = jnp.dtype(score3.dtype).itemsize
    tm = tile_pixels if tile_pixels is not None else _pick_pixel_tile(c, hw, itemsize)
    tm = max(128, (tm // 128) * 128)
    hw_pad = _round_up(hw, tm)
    n_tiles = hw_pad // tm

    blk_bytes = c * tm * itemsize
    vmem_limit = int(min(32 * 1024 * 1024, max(16 * 1024 * 1024, 16 * blk_bytes)))

    pixel_kernel = functools.partial(
        _ohem_pixel_kernel, ignore_label=ignore_label, hw=hw, tm=tm)
    loss, pred = pl.pallas_call(
        pixel_kernel,
        out_shape=(jax.ShapeDtypeStruct((n, 1, hw_pad), jnp.float32),
                   jax.ShapeDtypeStruct((n, 1, hw_pad), jnp.float32)),
        grid=(n, n_tiles),
        in_specs=[pl.BlockSpec((None, c, tm), lambda nb, i: (nb, 0, i)),
                  pl.BlockSpec((None, 1, tm), lambda nb, i: (nb, 0, i))],
        out_specs=(pl.BlockSpec((None, 1, tm), lambda nb, i: (nb, 0, i)),
                   pl.BlockSpec((None, 1, tm), lambda nb, i: (nb, 0, i))),
        compiler_params=pltpu.CompilerParams(
            dimension_semantics=("parallel", "parallel"),
            vmem_limit_bytes=vmem_limit),
    )(score3, tgt3)

    # OHEM threshold: k-th smallest target-class prob among valid pixels
    # (ignored / padded pixels carry a 2.0 sentinel so they sort last and
    # k <= n_valid-1 never reaches them).
    total = n * hw_pad
    pred_flat = pred.reshape(total)
    n_valid = jnp.sum((target != ignore_label).astype(jnp.int32))
    k = jnp.clip(jnp.minimum(jnp.int32(min_kept), n_valid - 1), 0, total - 1)
    k_stat = int(min(min_kept + 1, total))
    if k_stat <= _TOPK_MAX:
        # Exact: the k_stat smallest preds, ascending.
        smallest = -jax.lax.top_k(-pred_flat, k_stat)[0]
        min_value = smallest[jnp.clip(k, 0, k_stat - 1)]
    else:
        # TODO(synk): replace this full sort with a histogram / counting
        # selection streamed alongside the pixel kernel for very large min_kept.
        min_value = jnp.sort(pred_flat)[k]
    threshold = jnp.maximum(min_value, jnp.float32(thres)).reshape(1, 1).astype(jnp.float32)

    # Masked reduction of kept losses. Only 8 B/pixel -> huge tiles; leading
    # 2-way "parallel" axis lets both v7x TensorCores work on it.
    tm_keep = min(64 * 1024, _round_up(total, 128))
    n_blocks = (total + tm_keep - 1) // tm_keep
    n_split = 2 if n_blocks >= 2 else 1
    n_inner = (n_blocks + n_split - 1) // n_split

    loss2 = loss.reshape(1, total)
    pred2 = pred.reshape(1, total)

    def _blk(p, i):
        # Clamp so split-overshoot blocks stay in bounds; they are excluded in
        # the kernel by the global-index mask.
        return (0, jnp.minimum(p * n_inner + i, n_blocks - 1))

    keep_kernel = functools.partial(_ohem_keep_kernel, tm=tm_keep, total=total)
    sum_p, cnt_p = pl.pallas_call(
        keep_kernel,
        out_shape=(jax.ShapeDtypeStruct((1, n_split * 128), jnp.float32),
                   jax.ShapeDtypeStruct((1, n_split * 128), jnp.float32)),
        grid=(n_split, n_inner),
        in_specs=[pl.BlockSpec(memory_space=pltpu.MemorySpace.SMEM),
                  pl.BlockSpec((1, tm_keep), _blk),
                  pl.BlockSpec((1, tm_keep), _blk)],
        out_specs=(pl.BlockSpec((1, 128), lambda p, i: (0, p)),
                   pl.BlockSpec((1, 128), lambda p, i: (0, p))),
        scratch_shapes=[pltpu.VMEM((1, tm_keep), jnp.float32),
                        pltpu.VMEM((1, tm_keep), jnp.float32)],
        compiler_params=pltpu.CompilerParams(
            dimension_semantics=("parallel", "arbitrary")),
    )(threshold, loss2, pred2)

    kept_sum = jnp.sum(sum_p)
    kept_cnt = jnp.sum(cnt_p)
    # Guard: an empty keep set (no valid pixels / strict '<' keeps nothing)
    # returns 0 instead of NaN; PyTorch would produce NaN or raise here.
    return kept_sum / jnp.maximum(kept_cnt, 1.0)


# ----------------------------------------------------------------------------
# Pure-JAX reference (mirrors the PyTorch forward) for a correctness check
# ----------------------------------------------------------------------------
def _ohem_reference(score, target, *, ignore_label, thres, min_kept):
    n, c, h, w = score.shape
    logits = jnp.transpose(score.astype(jnp.float32), (0, 2, 3, 1)).reshape(-1, c)
    tgt = target.reshape(-1).astype(jnp.int32)
    valid = tgt != ignore_label
    t = jnp.where(valid, tgt, 0)
    lse = jax.nn.logsumexp(logits, axis=1)
    s_t = jnp.take_along_axis(logits, t[:, None], axis=1)[:, 0]
    loss = jnp.where(valid, lse - s_t, 0.0)
    prob = jnp.where(valid, jnp.exp(s_t - lse), 2.0)
    n_valid = jnp.sum(valid.astype(jnp.int32))
    k = jnp.clip(jnp.minimum(jnp.int32(max(1, min_kept)), n_valid - 1), 0, loss.size - 1)
    thr = jnp.maximum(jnp.sort(prob)[k], jnp.float32(thres))
    keep = (prob < thr).astype(jnp.float32)
    return jnp.sum(loss * keep) / jnp.sum(keep)


# ----------------------------------------------------------------------------
if __name__ == "__main__":
    key = jax.random.PRNGKey(0)
    ks, kt, ki = jax.random.split(key, 3)

    N, C, H, W = 2, 19, 32, 32
    score = 2.0 * jax.random.normal(ks, (N, C, H, W), jnp.float32)
    target = jax.random.randint(kt, (N, H, W), 0, C, jnp.int32)
    # mark ~10% of the pixels as ignored
    target = jnp.where(jax.random.bernoulli(ki, 0.1, (N, H, W)), 255, target)

    loss_fn = jax.jit(functools.partial(
        ohem_cross_entropy, ignore_label=255, thres=0.7, min_kept=100))
    loss = loss_fn(score, target)
    jax.block_until_ready(loss)

    ref = _ohem_reference(score, target, ignore_label=255, thres=0.7, min_kept=100)
    assert loss.shape == () and jnp.isfinite(loss)
    assert jnp.allclose(loss, ref, rtol=2e-3, atol=1e-5), (loss, ref)

    # Also exercise the bf16 streaming path (logits DMA'd as bf16, f32 math in-kernel).
    loss_bf16 = jax.jit(functools.partial(
        ohem_cross_entropy, ignore_label=255, thres=0.7, min_kept=100))(
            score.astype(jnp.bfloat16), target)
    jax.block_until_ready(loss_bf16)
    assert jnp.isfinite(loss_bf16) and jnp.allclose(loss_bf16, ref, rtol=3e-2, atol=1e-3)

    print("KERNEL_OK")
</pallas_src>

<mosaic_0001>
module attributes {stable_mosaic.version = 11 : i64} {
  func.func @_ohem_pixel_kernel(%arg0: i32, %arg1: i32, %arg2: memref<1x19x1024xf32, #tpu.memory_space<vmem>>, %arg3: memref<1x1x1024xi32, #tpu.memory_space<vmem>>, %arg4: memref<1x1x1024xf32, #tpu.memory_space<vmem>>, %arg5: memref<1x1x1024xf32, #tpu.memory_space<vmem>>) attributes {dimension_semantics = [#tpu.dimension_semantics<parallel>, #tpu.dimension_semantics<parallel>], iteration_bounds = array<i64: 2, 1>, scalar_prefetch = 0 : i64, scratch_operands = 0 : i64, tpu.core_type = #tpu.core_type<tc>, window_params = [{transform_indices = @transform_0, window_bounds = array<i64: 1, 19, 1024>}, {transform_indices = @transform_1, window_bounds = array<i64: 1, 1, 1024>}, {transform_indices = @transform_2, window_bounds = array<i64: 1, 1, 1024>}, {transform_indices = @transform_3, window_bounds = array<i64: 1, 1, 1024>}]} {
    %c0 = arith.constant 0 : index
    %c0_0 = arith.constant 0 : index
    %c0_1 = arith.constant 0 : index
    %0 = vector.load %arg2[%c0, %c0_0, %c0_1] : memref<1x19x1024xf32, #tpu.memory_space<vmem>>, vector<1x19x1024xf32>
    %1 = vector.shape_cast %0 : vector<1x19x1024xf32> to vector<19x1024xf32>
    %c0_2 = arith.constant 0 : index
    %c0_3 = arith.constant 0 : index
    %c0_4 = arith.constant 0 : index
    %2 = vector.load %arg3[%c0_2, %c0_3, %c0_4] : memref<1x1x1024xi32, #tpu.memory_space<vmem>>, vector<1x1x1024xi32>
    %3 = vector.shape_cast %2 : vector<1x1x1024xi32> to vector<1x1024xi32>
    %4 = tpu.iota {dimensions = array<i32: 1>} : vector<1x1024xi32>
    %c1024_i32 = arith.constant 1024 : i32
    %5 = arith.muli %arg1, %c1024_i32 : i32
    %6 = vector.broadcast %5 : i32 to vector<1x1024xi32>
    %7 = arith.addi %6, %4 : vector<1x1024xi32>
    %c1024_i32_5 = arith.constant 1024 : i32
    %8 = vector.broadcast %c1024_i32_5 : i32 to vector<1x1024xi32>
    %9 = arith.cmpi slt, %7, %8 : vector<1x1024xi32>
    %c255_i32 = arith.constant 255 : i32
    %10 = vector.broadcast %c255_i32 : i32 to vector<1x1024xi32>
    %11 = arith.cmpi ne, %3, %10 : vector<1x1024xi32>
    %12 = arith.andi %11, %9 : vector<1x1024xi1>
    %c0_i32 = arith.constant 0 : i32
    %13 = vector.broadcast %c0_i32 : i32 to vector<1x1024xi32>
    %14 = arith.select %12, %3, %13 : vector<1x1024xi1>, vector<1x1024xi32>
    %cst = arith.constant dense<0xFF800000> : vector<1024xf32>
    %15 = vector.multi_reduction <maximumf>, %1, %cst [0] : vector<19x1024xf32> to vector<1024xf32>
    %16 = vector.shape_cast %15 : vector<1024xf32> to vector<1x1024xf32>
    %17 = vector.broadcast %16 : vector<1x1024xf32> to vector<19x1024xf32>
    %18 = arith.subf %1, %17 : vector<19x1024xf32>
    %19 = math.exp %18 : vector<19x1024xf32>
    %cst_6 = arith.constant dense<0.000000e+00> : vector<1024xf32>
    %20 = vector.multi_reduction <add>, %19, %cst_6 [0] : vector<19x1024xf32> to vector<1024xf32>
    %21 = vector.shape_cast %20 : vector<1024xf32> to vector<1x1024xf32>
    %22 = math.log %21 : vector<1x1024xf32>
    %23 = arith.addf %16, %22 : vector<1x1024xf32>
    %24 = tpu.iota {dimensions = array<i32: 0>} : vector<19x1024xi32>
    %25 = vector.broadcast %14 : vector<1x1024xi32> to vector<19x1024xi32>
    %26 = arith.cmpi eq, %24, %25 : vector<19x1024xi32>
    %27 = arith.extui %26 : vector<19x1024xi1> to vector<19x1024xi32>
    %28 = arith.sitofp %27 : vector<19x1024xi32> to vector<19x1024xf32>
    %29 = arith.mulf %1, %28 : vector<19x1024xf32>
    %cst_7 = arith.constant dense<0.000000e+00> : vector<1024xf32>
    %30 = vector.multi_reduction <add>, %29, %cst_7 [0] : vector<19x1024xf32> to vector<1024xf32>
    %31 = vector.shape_cast %30 : vector<1024xf32> to vector<1x1024xf32>
    %32 = arith.subf %23, %31 : vector<1x1024xf32>
    %cst_8 = arith.constant 0.000000e+00 : f32
    %33 = vector.broadcast %cst_8 : f32 to vector<1x1024xf32>
    %34 = arith.select %12, %32, %33 : vector<1x1024xi1>, vector<1x1024xf32>
    %c0_9 = arith.constant 0 : index
    %c0_10 = arith.constant 0 : index
    %c0_11 = arith.constant 0 : index
    %35 = vector.load %arg4[%c0_9, %c0_10, %c0_11] : memref<1x1x1024xf32, #tpu.memory_space<vmem>>, vector<1x1x1024xf32>
    %36 = vector.shape_cast %35 : vector<1x1x1024xf32> to vector<1x1024xf32>
    %37 = vector.shape_cast %34 : vector<1x1024xf32> to vector<1x1x1024xf32>
    tpu.vector_store %arg4[%c0_9, %c0_10, %c0_11], %37 {strides = array<i32>} : memref<1x1x1024xf32, #tpu.memory_space<vmem>>, vector<1x1x1024xf32>,
    %38 = arith.subf %31, %23 : vector<1x1024xf32>
    %39 = math.exp %38 : vector<1x1024xf32>
    %cst_12 = arith.constant 2.000000e+00 : f32
    %40 = vector.broadcast %cst_12 : f32 to vector<1x1024xf32>
    %41 = arith.select %12, %39, %40 : vector<1x1024xi1>, vector<1x1024xf32>
    %c0_13 = arith.constant 0 : index
    %c0_14 = arith.constant 0 : index
    %c0_15 = arith.constant 0 : index
    %42 = vector.load %arg5[%c0_13, %c0_14, %c0_15] : memref<1x1x1024xf32, #tpu.memory_space<vmem>>, vector<1x1x1024xf32>
    %43 = vector.shape_cast %42 : vector<1x1x1024xf32> to vector<1x1024xf32>
    %44 = vector.shape_cast %41 : vector<1x1024xf32> to vector<1x1x1024xf32>
    tpu.vector_store %arg5[%c0_13, %c0_14, %c0_15], %44 {strides = array<i32>} : memref<1x1x1024xf32, #tpu.memory_space<vmem>>, vector<1x1x1024xf32>,
    return
  }
  func.func @transform_0(%arg0: i32, %arg1: i32) -> (i32, i32, i32) {
    %c0_i32 = arith.constant 0 : i32
    %c0_i32_0 = arith.constant 0 : i32
    return %arg0, %c0_i32, %arg1 : i32, i32, i32
  }
  func.func @transform_1(%arg0: i32, %arg1: i32) -> (i32, i32, i32) {
    %c0_i32 = arith.constant 0 : i32
    %c0_i32_0 = arith.constant 0 : i32
    return %arg0, %c0_i32, %arg1 : i32, i32, i32
  }
  func.func @transform_2(%arg0: i32, %arg1: i32) -> (i32, i32, i32) {
    %c0_i32 = arith.constant 0 : i32
    %c0_i32_0 = arith.constant 0 : i32
    return %arg0, %c0_i32, %arg1 : i32, i32, i32
  }
  func.func @transform_3(%arg0: i32, %arg1: i32) -> (i32, i32, i32) {
    %c0_i32 = arith.constant 0 : i32
    %c0_i32_0 = arith.constant 0 : i32
    return %arg0, %c0_i32, %arg1 : i32, i32, i32
  }
}

module attributes {stable_mosaic.version = 11 : i64} {
  func.func @_ohem_keep_kernel(%arg0: i32, %arg1: i32, %arg2: memref<1x1xf32, #tpu.memory_space<smem>>, %arg3: memref<1x2048xf32, #tpu.memory_space<vmem>>, %arg4: memref<1x2048xf32, #tpu.memory_space<vmem>>, %arg5: memref<1x128xf32, #tpu.memory_space<vmem>>, %arg6: memref<1x128xf32, #tpu.memory_space<vmem>>, %arg7: memref<1x2048xf32, #tpu.memory_space<vmem>>, %arg8: memref<1x2048xf32, #tpu.memory_space<vmem>>) attributes {dimension_semantics = [#tpu.dimension_semantics<parallel>, #tpu.dimension_semantics<arbitrary>], iteration_bounds = array<i64: 1, 1>, scalar_prefetch = 0 : i64, scratch_operands = 2 : i64, tpu.core_type = #tpu.core_type<tc>, window_params = [{transform_indices = @transform_0, window_bounds = array<i64: 1, 1>}, {transform_indices = @transform_1, window_bounds = array<i64: 1, 2048>}, {transform_indices = @transform_2, window_bounds = array<i64: 1, 2048>}, {transform_indices = @transform_3, window_bounds = array<i64: 1, 128>}, {transform_indices = @transform_4, window_bounds = array<i64: 1, 128>}]} {
    %c0_i32 = arith.constant 0 : i32
    %0 = arith.cmpi eq, %arg1, %c0_i32 : i32
    %1 = arith.extui %0 : i1 to i32
    %c0_i32_0 = arith.constant 0 : i32
    %2 = arith.cmpi ne, %1, %c0_i32_0 : i32
    scf.if %2 {
      %cst_19 = arith.constant 0.000000e+00 : f32
      %31 = vector.broadcast %cst_19 : f32 to vector<1x2048xf32>
      %c0_20 = arith.constant 0 : index
      %c0_21 = arith.constant 0 : index
      %32 = vector.load %arg7[%c0_20, %c0_21] : memref<1x2048xf32, #tpu.memory_space<vmem>>, vector<1x2048xf32>
      tpu.vector_store %arg7[%c0_20, %c0_21], %31 {strides = array<i32>} : memref<1x2048xf32, #tpu.memory_space<vmem>>, vector<1x2048xf32>,
      %cst_22 = arith.constant 0.000000e+00 : f32
      %33 = vector.broadcast %cst_22 : f32 to vector<1x2048xf32>
      %c0_23 = arith.constant 0 : index
      %c0_24 = arith.constant 0 : index
      %34 = vector.load %arg8[%c0_23, %c0_24] : memref<1x2048xf32, #tpu.memory_space<vmem>>, vector<1x2048xf32>
      tpu.vector_store %arg8[%c0_23, %c0_24], %33 {strides = array<i32>} : memref<1x2048xf32, #tpu.memory_space<vmem>>, vector<1x2048xf32>,
    } else {
    }
    %c1_i32 = arith.constant 1 : i32
    %3 = arith.muli %arg0, %c1_i32 : i32
    %4 = arith.addi %3, %arg1 : i32
    %5 = tpu.iota {dimensions = array<i32: 1>} : vector<1x2048xi32>
    %c2048_i32 = arith.constant 2048 : i32
    %6 = arith.muli %4, %c2048_i32 : i32
    %7 = vector.broadcast %6 : i32 to vector<1x2048xi32>
    %8 = arith.addi %7, %5 : vector<1x2048xi32>
    %c2048_i32_1 = arith.constant 2048 : i32
    %9 = vector.broadcast %c2048_i32_1 : i32 to vector<1x2048xi32>
    %10 = arith.cmpi slt, %8, %9 : vector<1x2048xi32>
    %c0 = arith.constant 0 : index
    %c0_2 = arith.constant 0 : index
    %11 = vector.load %arg4[%c0, %c0_2] : memref<1x2048xf32, #tpu.memory_space<vmem>>, vector<1x2048xf32>
    %c0_3 = arith.constant 0 : index
    %c0_4 = arith.constant 0 : index
    %12 = memref.load %arg2[%c0_3, %c0_4] : memref<1x1xf32, #tpu.memory_space<smem>>
    %13 = vector.broadcast %12 : f32 to vector<1x2048xf32>
    %14 = arith.cmpf olt, %11, %13 : vector<1x2048xf32>
    %15 = arith.andi %10, %14 : vector<1x2048xi1>
    %c0_5 = arith.constant 0 : index
    %c0_6 = arith.constant 0 : index
    %16 = vector.load %arg7[%c0_5, %c0_6] : memref<1x2048xf32, #tpu.memory_space<vmem>>, vector<1x2048xf32>
    %c0_7 = arith.constant 0 : index
    %c0_8 = arith.constant 0 : index
    %17 = vector.load %arg3[%c0_7, %c0_8] : memref<1x2048xf32, #tpu.memory_space<vmem>>, vector<1x2048xf32>
    %cst = arith.constant 0.000000e+00 : f32
    %18 = vector.broadcast %cst : f32 to vector<1x2048xf32>
    %19 = arith.select %15, %17, %18 : vector<1x2048xi1>, vector<1x2048xf32>
    %20 = arith.addf %16, %19 : vector<1x2048xf32>
    %c0_9 = arith.constant 0 : index
    %c0_10 = arith.constant 0 : index
    %21 = vector.load %arg7[%c0_9, %c0_10] : memref<1x2048xf32, #tpu.memory_space<vmem>>, vector<1x2048xf32>
    tpu.vector_store %arg7[%c0_9, %c0_10], %20 {strides = array<i32>} : memref<1x2048xf32, #tpu.memory_space<vmem>>, vector<1x2048xf32>,
    %c0_11 = arith.constant 0 : index
    %c0_12 = arith.constant 0 : index
    %22 = vector.load %arg8[%c0_11, %c0_12] : memref<1x2048xf32, #tpu.memory_space<vmem>>, vector<1x2048xf32>
    %cst_13 = arith.constant 1.000000e+00 : f32
    %cst_14 = arith.constant 0.000000e+00 : f32
    %23 = vector.broadcast %cst_13 : f32 to vector<1x2048xf32>
    %24 = vector.broadcast %cst_14 : f32 to vector<1x2048xf32>
    %25 = arith.select %15, %23, %24 : vector<1x2048xi1>, vector<1x2048xf32>
    %26 = arith.addf %22, %25 : vector<1x2048xf32>
    %c0_15 = arith.constant 0 : index
    %c0_16 = arith.constant 0 : index
    %27 = vector.load %arg8[%c0_15, %c0_16] : memref<1x2048xf32, #tpu.memory_space<vmem>>, vector<1x2048xf32>
    tpu.vector_store %arg8[%c0_15, %c0_16], %26 {strides = array<i32>} : memref<1x2048xf32, #tpu.memory_space<vmem>>, vector<1x2048xf32>,
    %c0_i32_17 = arith.constant 0 : i32
    %28 = arith.cmpi eq, %arg1, %c0_i32_17 : i32
    %29 = arith.extui %28 : i1 to i32
    %c0_i32_18 = arith.constant 0 : i32
    %30 = arith.cmpi ne, %29, %c0_i32_18 : i32
    scf.if %30 {
      %31 = tpu.iota {dimensions = array<i32: 1>} : vector<1x128xi32>
      %c0_19 = arith.constant 0 : index
      %c0_20 = arith.constant 0 : index
      %32 = vector.load %arg7[%c0_19, %c0_20] : memref<1x2048xf32, #tpu.memory_space<vmem>>, vector<1x2048xf32>
      %cst_21 = arith.constant dense<0.000000e+00> : vector<1xf32>
      %33 = vector.multi_reduction <add>, %32, %cst_21 [1] : vector<1x2048xf32> to vector<1xf32>
      %34 = vector.shape_cast %33 : vector<1xf32> to vector<1x1xf32>
      %c0_22 = arith.constant 0 : index
      %c0_23 = arith.constant 0 : index
      %35 = vector.load %arg8[%c0_22, %c0_23] : memref<1x2048xf32, #tpu.memory_space<vmem>>, vector<1x2048xf32>
      %cst_24 = arith.constant dense<0.000000e+00> : vector<1xf32>
      %36 = vector.multi_reduction <add>, %35, %cst_24 [1] : vector<1x2048xf32> to vector<1xf32>
      %37 = vector.shape_cast %36 : vector<1xf32> to vector<1x1xf32>
      %c0_i32_25 = arith.constant 0 : i32
      %38 = vector.broadcast %c0_i32_25 : i32 to vector<1x128xi32>
      %39 = arith.cmpi eq, %31, %38 : vector<1x128xi32>
      %cst_26 = arith.constant 0.000000e+00 : f32
      %40 = vector.shape_cast %34 : vector<1x1xf32> to vector<1x1xf32>
      %41 = vector.broadcast %40 : vector<1x1xf32> to vector<1x128xf32>
      %42 = vector.broadcast %cst_26 : f32 to vector<1x128xf32>
      %43 = arith.select %39, %41, %42 : vector<1x128xi1>, vector<1x128xf32>
      %c0_27 = arith.constant 0 : index
      %c0_28 = arith.constant 0 : index
      %44 = vector.load %arg5[%c0_27, %c0_28] : memref<1x128xf32, #tpu.memory_space<vmem>>, vector<1x128xf32>
      tpu.vector_store %arg5[%c0_27, %c0_28], %43 {strides = array<i32>} : memref<1x128xf32, #tpu.memory_space<vmem>>, vector<1x128xf32>,
      %c0_i32_29 = arith.constant 0 : i32
      %45 = vector.broadcast %c0_i32_29 : i32 to vector<1x128xi32>
      %46 = arith.cmpi eq, %31, %45 : vector<1x128xi32>
      %cst_30 = arith.constant 0.000000e+00 : f32
      %47 = vector.shape_cast %37 : vector<1x1xf32> to vector<1x1xf32>
      %48 = vector.broadcast %47 : vector<1x1xf32> to vector<1x128xf32>
      %49 = vector.broadcast %cst_30 : f32 to vector<1x128xf32>
      %50 = arith.select %46, %48, %49 : vector<1x128xi1>, vector<1x128xf32>
      %c0_31 = arith.constant 0 : index
      %c0_32 = arith.constant 0 : index
      %51 = vector.load %arg6[%c0_31, %c0_32] : memref<1x128xf32, #tpu.memory_space<vmem>>, vector<1x128xf32>
      tpu.vector_store %arg6[%c0_31, %c0_32], %50 {strides = array<i32>} : memref<1x128xf32, #tpu.memory_space<vmem>>, vector<1x128xf32>,
    } else {
    }
    return
  }
  func.func @transform_0(%arg0: i32, %arg1: i32) -> (i32, i32) {
    %c0_i32 = arith.constant 0 : i32
    %c0_i32_0 = arith.constant 0 : i32
    %c0_i32_1 = arith.constant 0 : i32
    return %c0_i32, %c0_i32_0 : i32, i32
  }
  func.func @transform_1(%arg0: i32, %arg1: i32) -> (i32, i32) {
    %c1_i32 = arith.constant 1 : i32
    %0 = arith.muli %arg0, %c1_i32 : i32
    %1 = arith.addi %0, %arg1 : i32
    %c0_i32 = arith.constant 0 : i32
    %2 = arith.minsi %1, %c0_i32 : i32
    %c0_i32_0 = arith.constant 0 : i32
    %c0_i32_1 = arith.constant 0 : i32
    return %c0_i32_0, %2 : i32, i32
  }
  func.func @transform_2(%arg0: i32, %arg1: i32) -> (i32, i32) {
    %c1_i32 = arith.constant 1 : i32
    %0 = arith.muli %arg0, %c1_i32 : i32
    %1 = arith.addi %0, %arg1 : i32
    %c0_i32 = arith.constant 0 : i32
    %2 = arith.minsi %1, %c0_i32 : i32
    %c0_i32_0 = arith.constant 0 : i32
    %c0_i32_1 = arith.constant 0 : i32
    return %c0_i32_0, %2 : i32, i32
  }
  func.func @transform_3(%arg0: i32, %arg1: i32) -> (i32, i32) {
    %c0_i32 = arith.constant 0 : i32
    %c0_i32_0 = arith.constant 0 : i32
    return %c0_i32, %arg0 : i32, i32
  }
  func.func @transform_4(%arg0: i32, %arg1: i32) -> (i32, i32) {
    %c0_i32 = arith.constant 0 : i32
    %c0_i32_0 = arith.constant 0 : i32
    return %c0_i32, %arg0 : i32, i32
  }
}

</mosaic_0001>

<llo_original>
// kernel: neg.0
$region0: #{neg.0}
  #allocation0 [shape = 's32[1]{0}', space=sflag, size = 0x4, scoped, tag = 'scoped memory for neg.0']
  %s0 = inlined_call_operand.vmem [shape: f32[2,1,1024], index: 0, kind: input, shape index: {}]
  %s1 = inlined_call_operand.vmem [shape: f32[2,1,1024], index: 1, kind: output, shape index: {}]
  %v2 = vld [vmem:[%s0] sm:$0x1]
  %3 = xla_tuple %v2
  %4 = xla_tuple %3
  %v5 = vxor.u32 %v2, 2147483648
  %6 = xla_tuple %v5
  %7 = vst [vmem:[%s1] sm:$0x1] %v5
  %s8 = scalar_lea.vmem %s0, 8
  %v9 = vld [vmem:[%s8] sm:$0x1]
  %10 = xla_tuple %v9
  %11 = xla_tuple %10
  %v12 = vxor.u32 %v9, 2147483648
  %13 = xla_tuple %v12
  %s14 = scalar_lea.vmem %s1, 8
  %15 = vst [vmem:[%s14] sm:$0x1] %v12
  %s16 = scalar_lea.vmem %s0, 1
  %v17 = vld [vmem:[%s16] sm:$0x1]
  %18 = xla_tuple %v17
  %19 = xla_tuple %18
  %v20 = vxor.u32 %v17, 2147483648
  %21 = xla_tuple %v20
  %s22 = scalar_lea.vmem %s1, 1
  %23 = vst [vmem:[%s22] sm:$0x1] %v20
  %s24 = scalar_lea.vmem %s0, 9
  %v25 = vld [vmem:[%s24] sm:$0x1]
  %26 = xla_tuple %v25
  %27 = xla_tuple %26
  %v28 = vxor.u32 %v25, 2147483648
  %29 = xla_tuple %v28
  %s30 = scalar_lea.vmem %s1, 9
  %31 = vst [vmem:[%s30] sm:$0x1] %v28
  %s32 = scalar_lea.vmem %s0, 2
  %v33 = vld [vmem:[%s32] sm:$0x1]
  %34 = xla_tuple %v33
  %35 = xla_tuple %34
  %v36 = vxor.u32 %v33, 2147483648
  %37 = xla_tuple %v36
  %s38 = scalar_lea.vmem %s1, 2
  %39 = vst [vmem:[%s38] sm:$0x1] %v36
  %s40 = scalar_lea.vmem %s0, 10
  %v41 = vld [vmem:[%s40] sm:$0x1]
  %42 = xla_tuple %v41
  %43 = xla_tuple %42
  %v44 = vxor.u32 %v41, 2147483648
  %45 = xla_tuple %v44
  %s46 = scalar_lea.vmem %s1, 10
  %47 = vst [vmem:[%s46] sm:$0x1] %v44
  %s48 = scalar_lea.vmem %s0, 3
  %v49 = vld [vmem:[%s48] sm:$0x1]
  %50 = xla_tuple %v49
  %51 = xla_tuple %50
  %v52 = vxor.u32 %v49, 2147483648
  %53 = xla_tuple %v52
  %s54 = scalar_lea.vmem %s1, 3
  %55 = vst [vmem:[%s54] sm:$0x1] %v52
  %s56 = scalar_lea.vmem %s0, 11
  %v57 = vld [vmem:[%s56] sm:$0x1]
  %58 = xla_tuple %v57
  %59 = xla_tuple %58
  %v60 = vxor.u32 %v57, 2147483648
  %61 = xla_tuple %v60
  %s62 = scalar_lea.vmem %s1, 11
  %63 = vst [vmem:[%s62] sm:$0x1] %v60
  %s64 = scalar_lea.vmem %s0, 4
  %v65 = vld [vmem:[%s64] sm:$0x1]
  %66 = xla_tuple %v65
  %67 = xla_tuple %66
  %v68 = vxor.u32 %v65, 2147483648
  %69 = xla_tuple %v68
  %s70 = scalar_lea.vmem %s1, 4
  %71 = vst [vmem:[%s70] sm:$0x1] %v68
  %s72 = scalar_lea.vmem %s0, 12
  %v73 = vld [vmem:[%s72] sm:$0x1]
  %74 = xla_tuple %v73
  %75 = xla_tuple %74
  %v76 = vxor.u32 %v73, 2147483648
  %77 = xla_tuple %v76
  %s78 = scalar_lea.vmem %s1, 12
  %79 = vst [vmem:[%s78] sm:$0x1] %v76
  %s80 = scalar_lea.vmem %s0, 5
  %v81 = vld [vmem:[%s80] sm:$0x1]
  %82 = xla_tuple %v81
  %83 = xla_tuple %82
  %v84 = vxor.u32 %v81, 2147483648
  %85 = xla_tuple %v84
  %s86 = scalar_lea.vmem %s1, 5
  %87 = vst [vmem:[%s86] sm:$0x1] %v84
  %s88 = scalar_lea.vmem %s0, 13
  %v89 = vld [vmem:[%s88] sm:$0x1]
  %90 = xla_tuple %v89
  %91 = xla_tuple %90
  %v92 = vxor.u32 %v89, 2147483648
  %93 = xla_tuple %v92
  %s94 = scalar_lea.vmem %s1, 13
  %95 = vst [vmem:[%s94] sm:$0x1] %v92
  %s96 = scalar_lea.vmem %s0, 6
  %v97 = vld [vmem:[%s96] sm:$0x1]
  %98 = xla_tuple %v97
  %99 = xla_tuple %98
  %v100 = vxor.u32 %v97, 2147483648
  %101 = xla_tuple %v100
  %s102 = scalar_lea.vmem %s1, 6
  %103 = vst [vmem:[%s102] sm:$0x1] %v100
  %s104 = scalar_lea.vmem %s0, 14
  %v105 = vld [vmem:[%s104] sm:$0x1]
  %106 = xla_tuple %v105
  %107 = xla_tuple %106
  %v108 = vxor.u32 %v105, 2147483648
  %109 = xla_tuple %v108
  %s110 = scalar_lea.vmem %s1, 14
  %111 = vst [vmem:[%s110] sm:$0x1] %v108
  %s112 = scalar_lea.vmem %s0, 7
  %v113 = vld [vmem:[%s112] sm:$0x1]
  %114 = xla_tuple %v113
  %115 = xla_tuple %114
  %v116 = vxor.u32 %v113, 2147483648
  %117 = xla_tuple %v116
  %s118 = scalar_lea.vmem %s1, 7
  %119 = vst [vmem:[%s118] sm:$0x1] %v116
  %s120 = scalar_lea.vmem %s0, 15
  %v121 = vld [vmem:[%s120] sm:$0x1]
  %122 = xla_tuple %v121
  %123 = xla_tuple %122
  %v124 = vxor.u32 %v121, 2147483648
  %125 = xla_tuple %v124
  %s126 = scalar_lea.vmem %s1, 15
  %127 = vst [vmem:[%s126] sm:$0x1] %v124

// kernel: ohem_cross_entropy.2
$region0: #{ohem_cross_entropy.2}
  #allocation0 [shape = 'u32[]', space=smem, size = 0x4, offset = 0x4, fixed_abs, tag = 'smem constant byte address 0x4 - core index']
  #allocation1 [shape = 'u32[144,128]{1,0:T(1,128)}', space=vmem, size = 0x12000, scoped, tag = 'internal scratch']
  %s0 = inlined_call_operand.vmem [shape: f32[2,19,1024], index: 0, kind: input, shape index: {}]
  %s1 = inlined_call_operand.vmem [shape: s32[2,1,1024], index: 1, kind: input, shape index: {}]
  %s2 = inlined_call_operand.vmem [shape: f32[2,1,1024], index: 2, kind: output, shape index: {0}]
  %s3 = inlined_call_operand.vmem [shape: f32[2,1,1024], index: 3, kind: output, shape index: {1}]
  %4 = xla_tuple %s2, %s3
  %s5 = sld [smem:[#allocation0]]
  $region49: #{ohem_cross_entropy.2} parent=0
    _
  %s7 = ssub.s32 1, %s5
  %s8 = scalar_select 0, %s7, %s5
  loop: start=0, step=1, limit=4
  $region2: #{ohem_cross_entropy.2} parent=0 // loop_pre_header
    _
  $region3: #{ohem_cross_entropy.2} parent=0 // loop_header
    %s10 = sphi 0, %s14
    %p11 = scmp.ge.s32.totalorder %s10, 4
    %s17 = sphi 0, %s29
    %s18 = sphi 0, %s25
    %s19 = sphi 0, %s17
    %s20 = sphi 0, %s18
    %s21 = sphi 0, %s19
    %s22 = sphi 0, %s20
    %s34 = sphi 0, %s36
    %s37 = sphi 0, %s34
    %s38 = sphi 0, %s37
    %s54 = sphi 0, %s38
    %s62 = sphi 0, %s64
    %s65 = sphi 0, %s62
    %s66 = sphi 0, %s65
    %s82 = sphi 0, %s66
    %s90 = sphi 0, %s92
    %s93 = sphi 0, %s90
    %s94 = sphi 0, %s93
    %s110 = sphi 0, %s94
    %s118 = sphi 0, %s120
    %s121 = sphi 0, %s118
    %s122 = sphi 0, %s121
    %s138 = sphi 0, %s122
  $region4: #{ohem_cross_entropy.2} parent=0 // loop_header_branch
    %13 = sbr.rel (%p11) target = $region8
  $region5: #{ohem_cross_entropy.2} parent=0 // loop_body
    %s15 = ssub.s32 %s10, 1
    %s16 = ssub.s32 %s10, 2
    %s23 = sadd.s32 1, %s18
    %p24 = scmp.ge.s32.totalorder %s23, 1
    %s25 = scalar_select %p24, 0, %s23
    %s26 = sadd.s32 1, %s17
    %s27 = scalar_select %p24, %s26, %s17
    %p28 = scmp.ge.s32.totalorder %s27, 2
    %s29 = scalar_select %p28, 0, %s27
    %s30 = ssub.s32 %s17, %s29
    %s31 = ssub.s32 %s18, %s25
    %s32 = sor.u32 %s30, %s31
    %p33 = scmp.eq.s32.totalorder %s32, 0
    %s35 = sadd.s32 %s34, 1
    %s36 = scalar_select %p33, %s34, %s35
    %p39 = pneg %p33
    %p40 = scmp.eq.s32.totalorder %s10, 1
    %p41 = por %p39, %p40
    %p42 = scmp.ne.s32.totalorder %s34, %s37
    %p43 = scmp.eq.s32.totalorder %s10, 0
    %p44 = por %p42, %p43
    %p45 = scmp.ne.s32.totalorder %s34, %s37
    %p46 = scmp.eq.s32.totalorder %s15, 1
    %p47 = por %p45, %p46
    %p48 = scmp.ne.s32.totalorder %s37, %s38
    %p49 = scmp.eq.s32.totalorder %s15, 0
    %p50 = por %p48, %p49
    %p51 = scmp.ne.s32.totalorder %s37, %s38
    %p52 = scmp.eq.s32.totalorder %s16, 1
    %p53 = por %p51, %p52
    %p55 = scmp.ne.s32.totalorder %s38, %s54
    %p56 = scmp.eq.s32.totalorder %s16, 0
    %p57 = por %p55, %p56
    %s58 = ssub.s32 %s17, %s29
    %s59 = ssub.s32 %s18, %s25
    %s60 = sor.u32 %s58, %s59
    %p61 = scmp.eq.s32.totalorder %s60, 0
    %s63 = sadd.s32 %s62, 1
    %s64 = scalar_select %p61, %s62, %s63
    %p67 = pneg %p61
    %p68 = scmp.eq.s32.totalorder %s10, 1
    %p69 = por %p67, %p68
    %p70 = scmp.ne.s32.totalorder %s62, %s65
    %p71 = scmp.eq.s32.totalorder %s10, 0
    %p72 = por %p70, %p71
    %p73 = scmp.ne.s32.totalorder %s62, %s65
    %p74 = scmp.eq.s32.totalorder %s15, 1
    %p75 = por %p73, %p74
    %p76 = scmp.ne.s32.totalorder %s65, %s66
    %p77 = scmp.eq.s32.totalorder %s15, 0
    %p78 = por %p76, %p77
    %p79 = scmp.ne.s32.totalorder %s65, %s66
    %p80 = scmp.eq.s32.totalorder %s16, 1
    %p81 = por %p79, %p80
    %p83 = scmp.ne.s32.totalorder %s66, %s82
    %p84 = scmp.eq.s32.totalorder %s16, 0
    %p85 = por %p83, %p84
    %s86 = ssub.s32 %s17, %s29
    %s87 = ssub.s32 %s18, %s25
    %s88 = sor.u32 %s86, %s87
    %p89 = scmp.eq.s32.totalorder %s88, 0
    %s91 = sadd.s32 %s90, 1
    %s92 = scalar_select %p89, %s90, %s91
    %p95 = pneg %p89
    %p96 = scmp.eq.s32.totalorder %s10, 1
    %p97 = por %p95, %p96
    %p98 = scmp.ne.s32.totalorder %s90, %s93
    %p99 = scmp.eq.s32.totalorder %s10, 0
    %p100 = por %p98, %p99
    %p101 = scmp.ne.s32.totalorder %s90, %s93
    %p102 = scmp.eq.s32.totalorder %s15, 1
    %p103 = por %p101, %p102
    %p104 = scmp.ne.s32.totalorder %s93, %s94
    %p105 = scmp.eq.s32.totalorder %s15, 0
    %p106 = por %p104, %p105
    %p107 = scmp.ne.s32.totalorder %s93, %s94
    %p108 = scmp.eq.s32.totalorder %s16, 1
    %p109 = por %p107, %p108
    %p111 = scmp.ne.s32.totalorder %s94, %s110
    %p112 = scmp.eq.s32.totalorder %s16, 0
    %p113 = por %p111, %p112
    %s114 = ssub.s32 %s17, %s29
    %s115 = ssub.s32 %s18, %s25
    %s116 = sor.u32 %s114, %s115
    %p117 = scmp.eq.s32.totalorder %s116, 0
    %s119 = sadd.s32 %s118, 1
    %s120 = scalar_select %p117, %s118, %s119
    %p123 = pneg %p117
    %p124 = scmp.eq.s32.totalorder %s10, 1
    %p125 = por %p123, %p124
    %p126 = scmp.ne.s32.totalorder %s118, %s121
    %p127 = scmp.eq.s32.totalorder %s10, 0
    %p128 = por %p126, %p127
    %p129 = scmp.ne.s32.totalorder %s118, %s121
    %p130 = scmp.eq.s32.totalorder %s15, 1
    %p131 = por %p129, %p130
    %p132 = scmp.ne.s32.totalorder %s121, %s122
    %p133 = scmp.eq.s32.totalorder %s15, 0
    %p134 = por %p132, %p133
    %p135 = scmp.ne.s32.totalorder %s121, %s122
    %p136 = scmp.eq.s32.totalorder %s16, 1
    %p137 = por %p135, %p136
    %p139 = scmp.ne.s32.totalorder %s122, %s138
    %p140 = scmp.eq.s32.totalorder %s16, 0
    %p141 = por %p139, %p140
    %p142 = scmp.le.s32.totalorder 1, %s10
    %p143 = scmp.lt.s32.totalorder %s10, 3
    %p144 = pnand %p142, %p143
    %p145 = pneg %p144
    // Predicated region
    $region9: #{ohem_cross_entropy.2} parent=5 // pred_check
      _
    $region10: #{ohem_cross_entropy.2} parent=5 // pred_check_branch
      %147 = sbr.rel (%p144) target = $region12
    $region11: #{ohem_cross_entropy.2} parent=5 // pred_region
      %s148 = ssub.s32 %s10, 1
    $region12: #{ohem_cross_entropy.2} parent=5 // pred_fallthru
      _
    %p149 = scmp.lt.s32.totalorder %s10, 2
    // Predicated region
    $region13: #{ohem_cross_entropy.2} parent=5 // pred_check
      %p150 = pneg %p149
    $region14: #{ohem_cross_entropy.2} parent=5 // pred_check_branch
      %152 = sbr.rel (%p150) target = $region16
    $region15: #{ohem_cross_entropy.2} parent=5 // pred_region
      // Predicated region
      $region17: #{ohem_cross_entropy.2} parent=15 // pred_check
        %p153 = pneg %p44
      $region18: #{ohem_cross_entropy.2} parent=15 // pred_check_branch
        %155 = sbr.rel (%p153) target = $region20
      $region19: #{ohem_cross_entropy.2} parent=15 // pred_region
        %s156 = smul.u32 8, %s18
        %p157 = scmp.lt.s32.totalorder %s17, 1
        %s158 = scalar_select %p157, %s17, 1
        %p159 = scmp.lt.s32.totalorder %s156, 7
        %s160 = scalar_select %p159, %s156, 7
        %s161 = smul.addr %s158, 24
        %s162 = sadd.s32 %s160, %s161
        %s163 = smul.addr %s162, 8
        %s164 = scalar_lea.vmem %s0, %s163
        %s165 = smul.u32 8, %s18
      $region20: #{ohem_cross_entropy.2} parent=15 // pred_fallthru
        _
      // Predicated region
      $region21: #{ohem_cross_entropy.2} parent=15 // pred_check
        %p166 = pneg %p72
      $region22: #{ohem_cross_entropy.2} parent=15 // pred_check_branch
        %168 = sbr.rel (%p166) target = $region24
      $region23: #{ohem_cross_entropy.2} parent=15 // pred_region
        %s169 = smul.u32 8, %s18
        %p170 = scmp.lt.s32.totalorder %s17, 1
        %s171 = scalar_select %p170, %s17, 1
        %p172 = scmp.lt.s32.totalorder %s169, 7
        %s173 = scalar_select %p172, %s169, 7
        %s174 = smul.addr %s171, 8
        %s175 = sadd.s32 %s173, %s174
        %s176 = scalar_lea.vmem %s1, %s175
        %s177 = smul.u32 8, %s18
      $region24: #{ohem_cross_entropy.2} parent=15 // pred_fallthru
        _
    $region16: #{ohem_cross_entropy.2} parent=5 // pred_fallthru
      _
    %p178 = scmp.le.s32.totalorder 1, %s10
    %p179 = scmp.lt.s32.totalorder %s10, 3
    %p180 = pnand %p178, %p179
    %p181 = pneg %p180
    // Predicated region
    $region25: #{ohem_cross_entropy.2} parent=5 // pred_check
      _
    $region26: #{ohem_cross_entropy.2} parent=5 // pred_check_branch
      %183 = sbr.rel (%p180) target = $region28
    $region27: #{ohem_cross_entropy.2} parent=5 // pred_region
      %s184 = ssub.s32 %s10, 1
      %s185 = smul.u32 8, %s20
      %p186 = scmp.lt.s32.totalorder %s19, 1
      %s187 = scalar_select %p186, %s19, 1
      %p188 = scmp.lt.s32.totalorder %s185, 7
      %s189 = scalar_select %p188, %s185, 7
      %s190 = smul.addr %s187, 24
      %s191 = sadd.s32 %s189, %s190
      %s192 = smul.addr %s191, 8
      %s193 = scalar_lea.vmem %s0, %s192
      %p194 = pneg %p50
      %p195 = pneg %p47
      %s196 = smul.u32 8, %s20
      %p197 = scmp.lt.s32.totalorder %s19, 1
      %s198 = scalar_select %p197, %s19, 1
      %p199 = scmp.lt.s32.totalorder %s196, 7
      %s200 = scalar_select %p199, %s196, 7
      %s201 = smul.addr %s198, 8
      %s202 = sadd.s32 %s200, %s201
      %s203 = scalar_lea.vmem %s1, %s202
      %p204 = pneg %p78
      %p205 = pneg %p75
      %p206 = pneg %p106
      %p207 = pneg %p103
      %s208 = smul.u32 8, %s20
      %p209 = scmp.lt.s32.totalorder %s19, 1
      %s210 = scalar_select %p209, %s19, 1
      %p211 = scmp.lt.s32.totalorder %s208, 7
      %s212 = scalar_select %p211, %s208, 7
      %s213 = smul.addr %s210, 8
      %s214 = sadd.s32 %s212, %s213
      %s215 = scalar_lea.vmem %s2, %s214
      %p216 = pneg %p134
      %p217 = pneg %p131
      %s218 = smul.u32 8, %s20
      %p219 = scmp.lt.s32.totalorder %s19, 1
      %s220 = scalar_select %p219, %s19, 1
      %p221 = scmp.lt.s32.totalorder %s218, 7
      %s222 = scalar_select %p221, %s218, 7
      %s223 = smul.addr %s220, 8
      %s224 = sadd.s32 %s222, %s223
      %s225 = scalar_lea.vmem %s3, %s224
      %s226 = smul.u32 8, %s20
      %p227 = scmp.lt.s32.totalorder %s19, 1
      %s228 = scalar_select %p227, %s19, 1
      %p229 = scmp.lt.s32.totalorder %s226, 7
      %s230 = scalar_select %p229, %s226, 7
      %s231 = smul.addr %s228, 24
      %s232 = sadd.s32 %s230, %s231
      %s233 = smul.addr %s232, 8
      %s234 = scalar_lea.vmem %s0, %s233
      %s235 = smul.u32 8, %s20
      %s236 = smul.u32 8, %s20
      %p237 = scmp.lt.s32.totalorder %s19, 1
      %s238 = scalar_select %p237, %s19, 1
      %p239 = scmp.lt.s32.totalorder %s236, 7
      %s240 = scalar_select %p239, %s236, 7
      %s241 = smul.addr %s238, 8
      %s242 = sadd.s32 %s240, %s241
      %s243 = scalar_lea.vmem %s1, %s242
      %s244 = smul.u32 8, %s20
      %s245 = smul.u32 8, %s20
      %p246 = scmp.lt.s32.totalorder %s19, 1
      %s247 = scalar_select %p246, %s19, 1
      %p248 = scmp.lt.s32.totalorder %s245, 7
      %s249 = scalar_select %p248, %s245, 7
      %s250 = smul.addr %s247, 8
      %s251 = sadd.s32 %s249, %s250
      %s252 = scalar_lea.vmem %s2, %s251
      %s253 = smul.u32 8, %s20
      %s254 = smul.u32 8, %s20
      %p255 = scmp.lt.s32.totalorder %s19, 1
      %s256 = scalar_select %p255, %s19, 1
      %p257 = scmp.lt.s32.totalorder %s254, 7
      %s258 = scalar_select %p257, %s254, 7
      %s259 = smul.addr %s256, 8
      %s260 = sadd.s32 %s258, %s259
      %s261 = scalar_lea.vmem %s3, %s260
      %s262 = smul.u32 8, %s20
      %v263 = vld [vmem:[%s234] sm:$0xff]
      %v264 = vld [vmem:[%s234 + $0x8] sm:$0xff]
      %v265 = vld [vmem:[%s234 + $0x10] sm:$0xff]
      %v266 = vld [vmem:[%s234 + $0x18] sm:$0xff]
      %v267 = vld [vmem:[%s234 + $0x20] sm:$0xff]
      %v268 = vld [vmem:[%s234 + $0x28] sm:$0xff]
      %v269 = vld [vmem:[%s234 + $0x30] sm:$0xff]
      %v270 = vld [vmem:[%s234 + $0x38] sm:$0xff]
      %v271 = vld [vmem:[%s234 + $0x40] sm:$0xff]
      %v272 = vld [vmem:[%s234 + $0x48] sm:$0xff]
      %v273 = vld [vmem:[%s234 + $0x50] sm:$0xff]
      %v274 = vld [vmem:[%s234 + $0x58] sm:$0xff]
      %v275 = vld [vmem:[%s234 + $0x60] sm:$0xff]
      %v276 = vld [vmem:[%s234 + $0x68] sm:$0xff]
      %v277 = vld [vmem:[%s234 + $0x70] sm:$0xff]
      %v278 = vld [vmem:[%s234 + $0x78] sm:$0xff]
      %v279 = vld [vmem:[%s234 + $0x80] sm:$0x7]
      %v280 = vld [vmem:[%s234 + $0x88] sm:$0x7]
      %v281 = vld [vmem:[%s234 + $0x90] sm:$0x7]
      %v282 = vld [vmem:[%s234 + $0x98] sm:$0x7]
      %v283 = vld [vmem:[%s234 + $0xa0] sm:$0x7]
      %v284 = vld [vmem:[%s234 + $0xa8] sm:$0x7]
      %v285 = vld [vmem:[%s234 + $0xb0] sm:$0x7]
      %v286 = vld [vmem:[%s234 + $0xb8] sm:$0x7]
      %v287 = vld [vmem:[%s243] sm:$0xff]
      %v288 = vlaneseq
      %v289 = vand.u32 %v288, 127
      %v290 = vadd.s32 %v289, 128
      %v291 = vadd.s32 %v289, 256
      %v292 = vadd.s32 %v289, 384
      %v293 = vadd.s32 %v289, 512
      %v294 = vadd.s32 %v289, 640
      %v295 = vadd.s32 %v289, 768
      %v296 = vadd.s32 %v289, 896
      %s297 = smul.u32 %s20, 1024
      %v298 = vstv %s297
      %v299 = vadd.s32 %v298, %v289
      %v300 = vadd.s32 %v298, %v290
      %v301 = vadd.s32 %v298, %v291
      %v302 = vadd.s32 %v298, %v292
      %v303 = vadd.s32 %v298, %v293
      %v304 = vadd.s32 %v298, %v294
      %v305 = vadd.s32 %v298, %v295
      %v306 = vadd.s32 %v298, %v296
      %vm307 = vcmp.lt.s32.totalorder %v299, 1024
      %vm308 = vcmp.lt.s32.totalorder %v300, 1024
      %vm309 = vcmp.lt.s32.totalorder %v301, 1024
      %vm310 = vcmp.lt.s32.totalorder %v302, 1024
      %vm311 = vcmp.lt.s32.totalorder %v303, 1024
      %vm312 = vcmp.lt.s32.totalorder %v304, 1024
      %vm313 = vcmp.lt.s32.totalorder %v305, 1024
      %vm314 = vcmp.lt.s32.totalorder %v306, 1024
      %vm315 = vcmp.ne.s32.totalorder %v287, 255
      %v316 = vsel %vm307, 1, 0
      %v317 = vsel %vm308, 1, 0
      %v318 = vsel %vm309, 1, 0
      %v319 = vsel %vm310, 1, 0
      %v320 = vsel %vm311, 1, 0
      %v321 = vsel %vm312, 1, 0
      %v322 = vsel %vm313, 1, 0
      %v323 = vsel %vm314, 1, 0
      %v324 = vcombine.low %v316, %v317
      %v325 = vcombine.low %v318, %v319
      %v326 = vcombine.low %v320, %v321
      %v327 = vcombine.low %v322, %v323
      %v329 = vunpack.c.l.s4 1966171168
      %v330 = vunpack.c.0.s8 %v329
      %v331 = vlaneseq
      %v332 = vshrl.u32 %v331, 7
      %v333 = vsub.s32 %v330, %v332
      %v334 = vrot.slane %v324, %v333
      %v336 = vunpack.c.l.s4 1966171168
      %v337 = vunpack.c.0.s8 %v336
      %v338 = vlaneseq
      %v339 = vshrl.u32 %v338, 7
      %v340 = vsub.s32 %v337, %v339
      %v341 = vrot.slane %v325, %v340
      %v343 = vunpack.c.l.s4 1966171168
      %v344 = vunpack.c.0.s8 %v343
      %v345 = vlaneseq
      %v346 = vshrl.u32 %v345, 7
      %v347 = vsub.s32 %v344, %v346
      %v348 = vrot.slane %v326, %v347
      %v350 = vunpack.c.l.s4 1966171168
      %v351 = vunpack.c.0.s8 %v350
      %v352 = vlaneseq
      %v353 = vshrl.u32 %v352, 7
      %v354 = vsub.s32 %v351, %v353
      %v355 = vrot.slane %v327, %v354
      %v356 = vcombine.low %v334, %v341
      %v357 = vcombine.low %v348, %v355
      %v359 = vunpack.c.l.s4 1966171168
      %v360 = vunpack.c.0.s8 %v359
      %v361 = vlaneseq
      %v362 = vshrl.u32 %v361, 7
      %v363 = vsub.s32 %v360, %v362
      %v364 = vrot.slane %v356, %v363
      %v366 = vunpack.c.l.s4 1966171168
      %v367 = vunpack.c.0.s8 %v366
      %v368 = vlaneseq
      %v369 = vshrl.u32 %v368, 7
      %v370 = vsub.s32 %v367, %v369
      %v371 = vrot.slane %v357, %v370
      %v372 = vcombine.low %v364, %v371
      %vm373 = vcmp.ne.s32.totalorder %v372, 0
      %vm374 = vmand %vm315, %vm373
      %v375 = vsel %vm374, %v287, 0
      %v376 = vmax.f32 %v263, %v271
      %vm377 = vcmask 1042432
      %v378 = vsel %vm377, %v279, -inf
      %v379 = vmax.f32 %v376, %v378
      %v380 = vrot.slane %v379, 4
      %v381 = vmax.f32 %v379, %v380
      %v382 = vrot.slane %v381, 2
      %v383 = vmax.f32 %v381, %v382
      %v384 = vrot.slane %v383, 1
      %v385 = vmax.f32 %v383, %v384
      %v386 = vmax.f32 %v264, %v272
      %v387 = vsel %vm377, %v280, -inf
      %v388 = vmax.f32 %v386, %v387
      %v389 = vrot.slane %v388, 4
      %v390 = vmax.f32 %v388, %v389
      %v391 = vrot.slane %v390, 2
      %v392 = vmax.f32 %v390, %v391
      %v393 = vrot.slane %v392, 1
      %v394 = vmax.f32 %v392, %v393
      %v395 = vmax.f32 %v265, %v273
      %v396 = vsel %vm377, %v281, -inf
      %v397 = vmax.f32 %v395, %v396
      %v398 = vrot.slane %v397, 4
      %v399 = vmax.f32 %v397, %v398
      %v400 = vrot.slane %v399, 2
      %v401 = vmax.f32 %v399, %v400
      %v402 = vrot.slane %v401, 1
      %v403 = vmax.f32 %v401, %v402
      %v404 = vmax.f32 %v266, %v274
      %v405 = vsel %vm377, %v282, -inf
      %v406 = vmax.f32 %v404, %v405
      %v407 = vrot.slane %v406, 4
      %v408 = vmax.f32 %v406, %v407
      %v409 = vrot.slane %v408, 2
      %v410 = vmax.f32 %v408, %v409
      %v411 = vrot.slane %v410, 1
      %v412 = vmax.f32 %v410, %v411
      %v413 = vmax.f32 %v267, %v275
      %v414 = vsel %vm377, %v283, -inf
      %v415 = vmax.f32 %v413, %v414
      %v416 = vrot.slane %v415, 4
      %v417 = vmax.f32 %v415, %v416
      %v418 = vrot.slane %v417, 2
      %v419 = vmax.f32 %v417, %v418
      %v420 = vrot.slane %v419, 1
      %v421 = vmax.f32 %v419, %v420
      %v422 = vmax.f32 %v268, %v276
      %v423 = vsel %vm377, %v284, -inf
      %v424 = vmax.f32 %v422, %v423
      %v425 = vrot.slane %v424, 4
      %v426 = vmax.f32 %v424, %v425
      %v427 = vrot.slane %v426, 2
      %v428 = vmax.f32 %v426, %v427
      %v429 = vrot.slane %v428, 1
      %v430 = vmax.f32 %v428, %v429
      %v431 = vmax.f32 %v269, %v277
      %v432 = vsel %vm377, %v285, -inf
      %v433 = vmax.f32 %v431, %v432
      %v434 = vrot.slane %v433, 4
      %v435 = vmax.f32 %v433, %v434
      %v436 = vrot.slane %v435, 2
      %v437 = vmax.f32 %v435, %v436
      %v438 = vrot.slane %v437, 1
      %v439 = vmax.f32 %v437, %v438
      %v440 = vmax.f32 %v270, %v278
      %v441 = vsel %vm377, %v286, -inf
      %v442 = vmax.f32 %v440, %v441
      %v443 = vrot.slane %v442, 4
      %v444 = vmax.f32 %v442, %v443
      %v445 = vrot.slane %v444, 2
      %v446 = vmax.f32 %v444, %v445
      %v447 = vrot.slane %v446, 1
      %v448 = vmax.f32 %v446, %v447
      %v449 = vsub.f32 %v263, %v385
      %v450 = vsub.f32 %v264, %v394
      %v451 = vsub.f32 %v265, %v403
      %v452 = vsub.f32 %v266, %v412
      %v453 = vsub.f32 %v267, %v421
      %v454 = vsub.f32 %v268, %v430
      %v455 = vsub.f32 %v269, %v439
      %v456 = vsub.f32 %v270, %v448
      %v457 = vsub.f32 %v271, %v385
      %v458 = vsub.f32 %v272, %v394
      %v459 = vsub.f32 %v273, %v403
      %v460 = vsub.f32 %v274, %v412
      %v461 = vsub.f32 %v275, %v421
      %v462 = vsub.f32 %v276, %v430
      %v463 = vsub.f32 %v277, %v439
      %v464 = vsub.f32 %v278, %v448
      %v465 = vsub.f32 %v279, %v385
      %v466 = vsub.f32 %v280, %v394
      %v467 = vsub.f32 %v281, %v403
      %v468 = vsub.f32 %v282, %v412
      %v469 = vsub.f32 %v283, %v421
      %v470 = vsub.f32 %v284, %v430
      %v471 = vsub.f32 %v285, %v439
      %v472 = vsub.f32 %v286, %v448
      %v473 = vmul.f32 %v449, 1.442695
      %v474 = vpow.pop %v473
      %v475 = vmul.f32 %v450, 1.442695
      %v476 = vpow.pop %v475
      %v477 = vmul.f32 %v451, 1.442695
      %v478 = vpow.pop %v477
      %v479 = vmul.f32 %v452, 1.442695
      %v480 = vpow.pop %v479
      %v481 = vmul.f32 %v453, 1.442695
      %v482 = vpow.pop %v481
      %v483 = vmul.f32 %v454, 1.442695
      %v484 = vpow.pop %v483
      %v485 = vmul.f32 %v455, 1.442695
      %v486 = vpow.pop %v485
      %v487 = vmul.f32 %v456, 1.442695
      %v488 = vpow.pop %v487
      %v489 = vmul.f32 %v457, 1.442695
      %v490 = vpow.pop %v489
      %v491 = vmul.f32 %v458, 1.442695
      %v492 = vpow.pop %v491
      %v493 = vmul.f32 %v459, 1.442695
      %v494 = vpow.pop %v493
      %v495 = vmul.f32 %v460, 1.442695
      %v496 = vpow.pop %v495
      %v497 = vmul.f32 %v461, 1.442695
      %v498 = vpow.pop %v497
      %v499 = vmul.f32 %v462, 1.442695
      %v500 = vpow.pop %v499
      %v501 = vmul.f32 %v463, 1.442695
      %v502 = vpow.pop %v501
      %v503 = vmul.f32 %v464, 1.442695
      %v504 = vpow.pop %v503
      %v505 = vmul.f32 %v465, 1.442695
      %v506 = vpow.pop %v505
      %v507 = vmul.f32 %v466, 1.442695
      %v508 = vpow.pop %v507
      %v509 = vmul.f32 %v467, 1.442695
      %v510 = vpow.pop %v509
      %v511 = vmul.f32 %v468, 1.442695
      %v512 = vpow.pop %v511
      %v513 = vmul.f32 %v469, 1.442695
      %v514 = vpow.pop %v513
      %v515 = vmul.f32 %v470, 1.442695
      %v516 = vpow.pop %v515
      %v517 = vmul.f32 %v471, 1.442695
      %v518 = vpow.pop %v517
      %v519 = vmul.f32 %v472, 1.442695
      %v520 = vpow.pop %v519
      %v521 = vadd.f32 %v474, %v490
      %v522 = vsel %vm377, %v506, 0.0
      %v523 = vadd.f32 %v521, %v522
      %v524 = vrot.slane %v523, 4
      %v525 = vadd.f32 %v523, %v524
      %v526 = vrot.slane %v525, 2
      %v527 = vadd.f32 %v525, %v526
      %v528 = vrot.slane %v527, 1
      %v529 = vadd.f32 %v527, %v528
      %v530 = vadd.f32 %v476, %v492
      %v531 = vsel %vm377, %v508, 0.0
      %v532 = vadd.f32 %v530, %v531
      %v533 = vrot.slane %v532, 4
      %v534 = vadd.f32 %v532, %v533
      %v535 = vrot.slane %v534, 2
      %v536 = vadd.f32 %v534, %v535
      %v537 = vrot.slane %v536, 1
      %v538 = vadd.f32 %v536, %v537
      %v539 = vadd.f32 %v478, %v494
      %v540 = vsel %vm377, %v510, 0.0
      %v541 = vadd.f32 %v539, %v540
      %v542 = vrot.slane %v541, 4
      %v543 = vadd.f32 %v541, %v542
      %v544 = vrot.slane %v543, 2
      %v545 = vadd.f32 %v543, %v544
      %v546 = vrot.slane %v545, 1
      %v547 = vadd.f32 %v545, %v546
      %v548 = vadd.f32 %v480, %v496
      %v549 = vsel %vm377, %v512, 0.0
      %v550 = vadd.f32 %v548, %v549
      %v551 = vrot.slane %v550, 4
      %v552 = vadd.f32 %v550, %v551
      %v553 = vrot.slane %v552, 2
      %v554 = vadd.f32 %v552, %v553
      %v555 = vrot.slane %v554, 1
      %v556 = vadd.f32 %v554, %v555
      %v557 = vadd.f32 %v482, %v498
      %v558 = vsel %vm377, %v514, 0.0
      %v559 = vadd.f32 %v557, %v558
      %v560 = vrot.slane %v559, 4
      %v561 = vadd.f32 %v559, %v560
      %v562 = vrot.slane %v561, 2
      %v563 = vadd.f32 %v561, %v562
      %v564 = vrot.slane %v563, 1
      %v565 = vadd.f32 %v563, %v564
      %v566 = vadd.f32 %v484, %v500
      %v567 = vsel %vm377, %v516, 0.0
      %v568 = vadd.f32 %v566, %v567
      %v569 = vrot.slane %v568, 4
      %v570 = vadd.f32 %v568, %v569
      %v571 = vrot.slane %v570, 2
      %v572 = vadd.f32 %v570, %v571
      %v573 = vrot.slane %v572, 1
      %v574 = vadd.f32 %v572, %v573
      %v575 = vadd.f32 %v486, %v502
      %v576 = vsel %vm377, %v518, 0.0
      %v577 = vadd.f32 %v575, %v576
      %v578 = vrot.slane %v577, 4
      %v579 = vadd.f32 %v577, %v578
      %v580 = vrot.slane %v579, 2
      %v581 = vadd.f32 %v579, %v580
      %v582 = vrot.slane %v581, 1
      %v583 = vadd.f32 %v581, %v582
      %v584 = vadd.f32 %v488, %v504
      %v585 = vsel %vm377, %v520, 0.0
      %v586 = vadd.f32 %v584, %v585
      %v587 = vrot.slane %v586, 4
      %v588 = vadd.f32 %v586, %v587
      %v589 = vrot.slane %v588, 2
      %v590 = vadd.f32 %v588, %v589
      %v591 = vrot.slane %v590, 1
      %v592 = vadd.f32 %v590, %v591
      %v593 = vlog2.pop %v529
      %v594 = vmul.f32 %v593, 0.6931472
      %v595 = vlog2.pop %v538
      %v596 = vmul.f32 %v595, 0.6931472
      %v597 = vlog2.pop %v547
      %v598 = vmul.f32 %v597, 0.6931472
      %v599 = vlog2.pop %v556
      %v600 = vmul.f32 %v599, 0.6931472
      %v601 = vlog2.pop %v565
      %v602 = vmul.f32 %v601, 0.6931472
      %v603 = vlog2.pop %v574
      %v604 = vmul.f32 %v603, 0.6931472
      %v605 = vlog2.pop %v583
      %v606 = vmul.f32 %v605, 0.6931472
      %v607 = vlog2.pop %v592
      %v608 = vmul.f32 %v607, 0.6931472
      %v609 = vadd.f32 %v385, %v594
      %v610 = vadd.f32 %v394, %v596
      %v611 = vadd.f32 %v403, %v598
      %v612 = vadd.f32 %v412, %v600
      %v613 = vadd.f32 %v421, %v602
      %v614 = vadd.f32 %v430, %v604
      %v615 = vadd.f32 %v439, %v606
      %v616 = vadd.f32 %v448, %v608
      %v617 = vlaneseq
      %v618 = vshrl.u32 %v617, 7
      %v619 = vadd.s32 %v618, 8
      %v620 = vadd.s32 %v618, 16
      %v621 = vlaneseq
      %v622 = vshrl.u32 %v621, 7
      %v623 = vsub.s32 0, %v622
      %v624 = vrot.slane %v375, %v623
      %v625 = vlaneseq
      %v626 = vshrl.u32 %v625, 7
      %v627 = vsub.s32 1, %v626
      %v628 = vrot.slane %v375, %v627
      %v629 = vlaneseq
      %v630 = vshrl.u32 %v629, 7
      %v631 = vsub.s32 2, %v630
      %v632 = vrot.slane %v375, %v631
      %v633 = vlaneseq
      %v634 = vshrl.u32 %v633, 7
      %v635 = vsub.s32 3, %v634
      %v636 = vrot.slane %v375, %v635
      %v637 = vlaneseq
      %v638 = vshrl.u32 %v637, 7
      %v639 = vsub.s32 4, %v638
      %v640 = vrot.slane %v375, %v639
      %v641 = vlaneseq
      %v642 = vshrl.u32 %v641, 7
      %v643 = vsub.s32 5, %v642
      %v644 = vrot.slane %v375, %v643
      %v645 = vlaneseq
      %v646 = vshrl.u32 %v645, 7
      %v647 = vsub.s32 6, %v646
      %v648 = vrot.slane %v375, %v647
      %v649 = vlaneseq
      %v650 = vshrl.u32 %v649, 7
      %v651 = vsub.s32 7, %v650
      %v652 = vrot.slane %v375, %v651
      %vm653 = vcmp.eq.s32.totalorder %v618, %v624
      %vm654 = vcmp.eq.s32.totalorder %v618, %v628
      %vm655 = vcmp.eq.s32.totalorder %v618, %v632
      %vm656 = vcmp.eq.s32.totalorder %v618, %v636
      %vm657 = vcmp.eq.s32.totalorder %v618, %v640
      %vm658 = vcmp.eq.s32.totalorder %v618, %v644
      %vm659 = vcmp.eq.s32.totalorder %v618, %v648
      %vm660 = vcmp.eq.s32.totalorder %v618, %v652
      %vm661 = vcmp.eq.s32.totalorder %v619, %v624
      %vm662 = vcmp.eq.s32.totalorder %v619, %v628
      %vm663 = vcmp.eq.s32.totalorder %v619, %v632
      %vm664 = vcmp.eq.s32.totalorder %v619, %v636
      %vm665 = vcmp.eq.s32.totalorder %v619, %v640
      %vm666 = vcmp.eq.s32.totalorder %v619, %v644
      %vm667 = vcmp.eq.s32.totalorder %v619, %v648
      %vm668 = vcmp.eq.s32.totalorder %v619, %v652
      %vm669 = vcmp.eq.s32.totalorder %v620, %v624
      %vm670 = vcmp.eq.s32.totalorder %v620, %v628
      %vm671 = vcmp.eq.s32.totalorder %v620, %v632
      %vm672 = vcmp.eq.s32.totalorder %v620, %v636
      %vm673 = vcmp.eq.s32.totalorder %v620, %v640
      %vm674 = vcmp.eq.s32.totalorder %v620, %v644
      %vm675 = vcmp.eq.s32.totalorder %v620, %v648
      %vm676 = vcmp.eq.s32.totalorder %v620, %v652
      %v677 = vsel %vm653, 1, 0
      %v678 = vsel %vm654, 1, 0
      %v679 = vsel %vm655, 1, 0
      %v680 = vsel %vm656, 1, 0
      %v681 = vsel %vm657, 1, 0
      %v682 = vsel %vm658, 1, 0
      %v683 = vsel %vm659, 1, 0
      %v684 = vsel %vm660, 1, 0
      %v685 = vsel %vm661, 1, 0
      %v686 = vsel %vm662, 1, 0
      %v687 = vsel %vm663, 1, 0
      %v688 = vsel %vm664, 1, 0
      %v689 = vsel %vm665, 1, 0
      %v690 = vsel %vm666, 1, 0
      %v691 = vsel %vm667, 1, 0
      %v692 = vsel %vm668, 1, 0
      %v693 = vsel %vm669, 1, 0
      %v694 = vsel %vm670, 1, 0
      %v695 = vsel %vm671, 1, 0
      %v696 = vsel %vm672, 1, 0
      %v697 = vsel %vm673, 1, 0
      %v698 = vsel %vm674, 1, 0
      %v699 = vsel %vm675, 1, 0
      %v700 = vsel %vm676, 1, 0
      %v701 = vcvt.s32.f32 %v677
      %v702 = vcvt.s32.f32 %v678
      %v703 = vcvt.s32.f32 %v679
      %v704 = vcvt.s32.f32 %v680
      %v705 = vcvt.s32.f32 %v681
      %v706 = vcvt.s32.f32 %v682
      %v707 = vcvt.s32.f32 %v683
      %v708 = vcvt.s32.f32 %v684
      %v709 = vcvt.s32.f32 %v685
      %v710 = vcvt.s32.f32 %v686
      %v711 = vcvt.s32.f32 %v687
      %v712 = vcvt.s32.f32 %v688
      %v713 = vcvt.s32.f32 %v689
      %v714 = vcvt.s32.f32 %v690
      %v715 = vcvt.s32.f32 %v691
      %v716 = vcvt.s32.f32 %v692
      %v717 = vcvt.s32.f32 %v693
      %v718 = vcvt.s32.f32 %v694
      %v719 = vcvt.s32.f32 %v695
      %v720 = vcvt.s32.f32 %v696
      %v721 = vcvt.s32.f32 %v697
      %v722 = vcvt.s32.f32 %v698
      %v723 = vcvt.s32.f32 %v699
      %v724 = vcvt.s32.f32 %v700
      %v725 = vmul.f32 %v263, %v701
      %v726 = vmul.f32 %v264, %v702
      %v727 = vmul.f32 %v265, %v703
      %v728 = vmul.f32 %v266, %v704
      %v729 = vmul.f32 %v267, %v705
      %v730 = vmul.f32 %v268, %v706
      %v731 = vmul.f32 %v269, %v707
      %v732 = vmul.f32 %v270, %v708
      %v733 = vmul.f32 %v271, %v709
      %v734 = vmul.f32 %v272, %v710
      %v735 = vmul.f32 %v273, %v711
      %v736 = vmul.f32 %v274, %v712
      %v737 = vmul.f32 %v275, %v713
      %v738 = vmul.f32 %v276, %v714
      %v739 = vmul.f32 %v277, %v715
      %v740 = vmul.f32 %v278, %v716
      %v741 = vmul.f32 %v279, %v717
      %v742 = vmul.f32 %v280, %v718
      %v743 = vmul.f32 %v281, %v719
      %v744 = vmul.f32 %v282, %v720
      %v745 = vmul.f32 %v283, %v721
      %v746 = vmul.f32 %v284, %v722
      %v747 = vmul.f32 %v285, %v723
      %v748 = vmul.f32 %v286, %v724
      %v749 = vadd.f32 %v725, %v733
      %v750 = vsel %vm377, %v741, 0.0
      %v751 = vadd.f32 %v749, %v750
      %v752 = vrot.slane %v751, 4
      %v753 = vadd.f32 %v751, %v752
      %v754 = vrot.slane %v753, 2
      %v755 = vadd.f32 %v753, %v754
      %v756 = vrot.slane %v755, 1
      %v757 = vadd.f32 %v755, %v756
      %v758 = vadd.f32 %v726, %v734
      %v759 = vsel %vm377, %v742, 0.0
      %v760 = vadd.f32 %v758, %v759
      %v761 = vrot.slane %v760, 4
      %v762 = vadd.f32 %v760, %v761
      %v763 = vrot.slane %v762, 2
      %v764 = vadd.f32 %v762, %v763
      %v765 = vrot.slane %v764, 1
      %v766 = vadd.f32 %v764, %v765
      %v767 = vadd.f32 %v727, %v735
      %v768 = vsel %vm377, %v743, 0.0
      %v769 = vadd.f32 %v767, %v768
      %v770 = vrot.slane %v769, 4
      %v771 = vadd.f32 %v769, %v770
      %v772 = vrot.slane %v771, 2
      %v773 = vadd.f32 %v771, %v772
      %v774 = vrot.slane %v773, 1
      %v775 = vadd.f32 %v773, %v774
      %v776 = vadd.f32 %v728, %v736
      %v777 = vsel %vm377, %v744, 0.0
      %v778 = vadd.f32 %v776, %v777
      %v779 = vrot.slane %v778, 4
      %v780 = vadd.f32 %v778, %v779
      %v781 = vrot.slane %v780, 2
      %v782 = vadd.f32 %v780, %v781
      %v783 = vrot.slane %v782, 1
      %v784 = vadd.f32 %v782, %v783
      %v785 = vadd.f32 %v729, %v737
      %v786 = vsel %vm377, %v745, 0.0
      %v787 = vadd.f32 %v785, %v786
      %v788 = vrot.slane %v787, 4
      %v789 = vadd.f32 %v787, %v788
      %v790 = vrot.slane %v789, 2
      %v791 = vadd.f32 %v789, %v790
      %v792 = vrot.slane %v791, 1
      %v793 = vadd.f32 %v791, %v792
      %v794 = vadd.f32 %v730, %v738
      %v795 = vsel %vm377, %v746, 0.0
      %v796 = vadd.f32 %v794, %v795
      %v797 = vrot.slane %v796, 4
      %v798 = vadd.f32 %v796, %v797
      %v799 = vrot.slane %v798, 2
      %v800 = vadd.f32 %v798, %v799
      %v801 = vrot.slane %v800, 1
      %v802 = vadd.f32 %v800, %v801
      %v803 = vadd.f32 %v731, %v739
      %v804 = vsel %vm377, %v747, 0.0
      %v805 = vadd.f32 %v803, %v804
      %v806 = vrot.slane %v805, 4
      %v807 = vadd.f32 %v805, %v806
      %v808 = vrot.slane %v807, 2
      %v809 = vadd.f32 %v807, %v808
      %v810 = vrot.slane %v809, 1
      %v811 = vadd.f32 %v809, %v810
      %v812 = vadd.f32 %v732, %v740
      %v813 = vsel %vm377, %v748, 0.0
      %v814 = vadd.f32 %v812, %v813
      %v815 = vrot.slane %v814, 4
      %v816 = vadd.f32 %v814, %v815
      %v817 = vrot.slane %v816, 2
      %v818 = vadd.f32 %v816, %v817
      %v819 = vrot.slane %v818, 1
      %v820 = vadd.f32 %v818, %v819
      %v821 = vsub.f32 %v609, %v757
      %v822 = vsub.f32 %v610, %v766
      %v823 = vsub.f32 %v611, %v775
      %v824 = vsub.f32 %v612, %v784
      %v825 = vsub.f32 %v613, %v793
      %v826 = vsub.f32 %v614, %v802
      %v827 = vsub.f32 %v615, %v811
      %v828 = vsub.f32 %v616, %v820
      %v837 = vcombine.low %v821, %v822
      %v838 = vcombine.low %v823, %v824
      %v839 = vcombine.low %v825, %v826
      %v840 = vcombine.low %v827, %v828
      %v842 = vunpack.c.l.s4 1966171168
      %v843 = vunpack.c.0.s8 %v842
      %v844 = vlaneseq
      %v845 = vshrl.u32 %v844, 7
      %v846 = vsub.s32 %v843, %v845
      %v847 = vrot.slane %v837, %v846
      %v849 = vunpack.c.l.s4 1966171168
      %v850 = vunpack.c.0.s8 %v849
      %v851 = vlaneseq
      %v852 = vshrl.u32 %v851, 7
      %v853 = vsub.s32 %v850, %v852
      %v854 = vrot.slane %v838, %v853
      %v856 = vunpack.c.l.s4 1966171168
      %v857 = vunpack.c.0.s8 %v856
      %v858 = vlaneseq
      %v859 = vshrl.u32 %v858, 7
      %v860 = vsub.s32 %v857, %v859
      %v861 = vrot.slane %v839, %v860
      %v863 = vunpack.c.l.s4 1966171168
      %v864 = vunpack.c.0.s8 %v863
      %v865 = vlaneseq
      %v866 = vshrl.u32 %v865, 7
      %v867 = vsub.s32 %v864, %v866
      %v868 = vrot.slane %v840, %v867
      %v869 = vcombine.low %v847, %v854
      %v870 = vcombine.low %v861, %v868
      %v872 = vunpack.c.l.s4 1966171168
      %v873 = vunpack.c.0.s8 %v872
      %v874 = vlaneseq
      %v875 = vshrl.u32 %v874, 7
      %v876 = vsub.s32 %v873, %v875
      %v877 = vrot.slane %v869, %v876
      %v879 = vunpack.c.l.s4 1966171168
      %v880 = vunpack.c.0.s8 %v879
      %v881 = vlaneseq
      %v882 = vshrl.u32 %v881, 7
      %v883 = vsub.s32 %v880, %v882
      %v884 = vrot.slane %v870, %v883
      %v885 = vcombine.low %v877, %v884
      %v887 = vsel %vm374, %v885, 0.0
      %888 = vst [vmem:[%s252] sm:$0xff] %v887
      %v889 = vsub.f32 %v757, %v609
      %v890 = vsub.f32 %v766, %v610
      %v891 = vsub.f32 %v775, %v611
      %v892 = vsub.f32 %v784, %v612
      %v893 = vsub.f32 %v793, %v613
      %v894 = vsub.f32 %v802, %v614
      %v895 = vsub.f32 %v811, %v615
      %v896 = vsub.f32 %v820, %v616
      %v897 = vmul.f32 %v889, 1.442695
      %v898 = vpow.pop %v897
      %v899 = vmul.f32 %v890, 1.442695
      %v900 = vpow.pop %v899
      %v901 = vmul.f32 %v891, 1.442695
      %v902 = vpow.pop %v901
      %v903 = vmul.f32 %v892, 1.442695
      %v904 = vpow.pop %v903
      %v905 = vmul.f32 %v893, 1.442695
      %v906 = vpow.pop %v905
      %v907 = vmul.f32 %v894, 1.442695
      %v908 = vpow.pop %v907
      %v909 = vmul.f32 %v895, 1.442695
      %v910 = vpow.pop %v909
      %v911 = vmul.f32 %v896, 1.442695
      %v912 = vpow.pop %v911
      %v921 = vcombine.low %v898, %v900
      %v922 = vcombine.low %v902, %v904
      %v923 = vcombine.low %v906, %v908
      %v924 = vcombine.low %v910, %v912
      %v926 = vunpack.c.l.s4 1966171168
      %v927 = vunpack.c.0.s8 %v926
      %v928 = vlaneseq
      %v929 = vshrl.u32 %v928, 7
      %v930 = vsub.s32 %v927, %v929
      %v931 = vrot.slane %v921, %v930
      %v933 = vunpack.c.l.s4 1966171168
      %v934 = vunpack.c.0.s8 %v933
      %v935 = vlaneseq
      %v936 = vshrl.u32 %v935, 7
      %v937 = vsub.s32 %v934, %v936
      %v938 = vrot.slane %v922, %v937
      %v940 = vunpack.c.l.s4 1966171168
      %v941 = vunpack.c.0.s8 %v940
      %v942 = vlaneseq
      %v943 = vshrl.u32 %v942, 7
      %v944 = vsub.s32 %v941, %v943
      %v945 = vrot.slane %v923, %v944
      %v947 = vunpack.c.l.s4 1966171168
      %v948 = vunpack.c.0.s8 %v947
      %v949 = vlaneseq
      %v950 = vshrl.u32 %v949, 7
      %v951 = vsub.s32 %v948, %v950
      %v952 = vrot.slane %v924, %v951
      %v953 = vcombine.low %v931, %v938
      %v954 = vcombine.low %v945, %v952
      %v956 = vunpack.c.l.s4 1966171168
      %v957 = vunpack.c.0.s8 %v956
      %v958 = vlaneseq
      %v959 = vshrl.u32 %v958, 7
      %v960 = vsub.s32 %v957, %v959
      %v961 = vrot.slane %v953, %v960
      %v963 = vunpack.c.l.s4 1966171168
      %v964 = vunpack.c.0.s8 %v963
      %v965 = vlaneseq
      %v966 = vshrl.u32 %v965, 7
      %v967 = vsub.s32 %v964, %v966
      %v968 = vrot.slane %v954, %v967
      %v969 = vcombine.low %v961, %v968
      %v971 = vsel %vm374, %v969, 2.0
      %972 = vst [vmem:[%s261] sm:$0xff] %v971
      %s973 = smul.u32 8, %s20
      %p974 = scmp.lt.s32.totalorder %s19, 1
      %s975 = scalar_select %p974, %s19, 1
      %p976 = scmp.lt.s32.totalorder %s973, 7
      %s977 = scalar_select %p976, %s973, 7
      %s978 = smul.addr %s975, 8
      %s979 = sadd.s32 %s977, %s978
      %s980 = scalar_lea.vmem %s2, %s979
      %s981 = smul.u32 8, %s20
      %p982 = scmp.lt.s32.totalorder %s19, 1
      %s983 = scalar_select %p982, %s19, 1
      %p984 = scmp.lt.s32.totalorder %s981, 7
      %s985 = scalar_select %p984, %s981, 7
      %s986 = smul.addr %s983, 8
      %s987 = sadd.s32 %s985, %s986
      %s988 = scalar_lea.vmem %s3, %s987
      // Predicated region
      $region29: #{ohem_cross_entropy.2} parent=27 // pred_check
        %p989 = pneg %p103
      $region30: #{ohem_cross_entropy.2} parent=27 // pred_check_branch
        %991 = sbr.rel (%p989) target = $region32
      $region31: #{ohem_cross_entropy.2} parent=27 // pred_region
        %s992 = smul.u32 8, %s20
      $region32: #{ohem_cross_entropy.2} parent=27 // pred_fallthru
        _
      // Predicated region
      $region33: #{ohem_cross_entropy.2} parent=27 // pred_check
        %p993 = pneg %p131
      $region34: #{ohem_cross_entropy.2} parent=27 // pred_check_branch
        %995 = sbr.rel (%p993) target = $region36
      $region35: #{ohem_cross_entropy.2} parent=27 // pred_region
        %s996 = smul.u32 8, %s20
      $region36: #{ohem_cross_entropy.2} parent=27 // pred_fallthru
        _
    $region28: #{ohem_cross_entropy.2} parent=5 // pred_fallthru
      _
    %p997 = scmp.le.s32.totalorder 2, %s10
    // Predicated region
    $region37: #{ohem_cross_entropy.2} parent=5 // pred_check
      %p998 = pneg %p997
    $region38: #{ohem_cross_entropy.2} parent=5 // pred_check_branch
      %1000 = sbr.rel (%p998) target = $region40
    $region39: #{ohem_cross_entropy.2} parent=5 // pred_region
      %s1001 = ssub.s32 %s10, 2
      // Predicated region
      $region41: #{ohem_cross_entropy.2} parent=39 // pred_check
        %p1002 = pneg %p109
      $region42: #{ohem_cross_entropy.2} parent=39 // pred_check_branch
        %1004 = sbr.rel (%p1002) target = $region44
      $region43: #{ohem_cross_entropy.2} parent=39 // pred_region
        %s1005 = smul.u32 8, %s22
        %p1006 = scmp.lt.s32.totalorder %s21, 1
        %s1007 = scalar_select %p1006, %s21, 1
        %p1008 = scmp.lt.s32.totalorder %s1005, 7
        %s1009 = scalar_select %p1008, %s1005, 7
        %s1010 = smul.addr %s1007, 8
        %s1011 = sadd.s32 %s1009, %s1010
        %s1012 = scalar_lea.vmem %s2, %s1011
      $region44: #{ohem_cross_entropy.2} parent=39 // pred_fallthru
        _
      // Predicated region
      $region45: #{ohem_cross_entropy.2} parent=39 // pred_check
        %p1013 = pneg %p137
      $region46: #{ohem_cross_entropy.2} parent=39 // pred_check_branch
        %1015 = sbr.rel (%p1013) target = $region48
      $region47: #{ohem_cross_entropy.2} parent=39 // pred_region
        %s1016 = smul.u32 8, %s22
        %p1017 = scmp.lt.s32.totalorder %s21, 1
        %s1018 = scalar_select %p1017, %s21, 1
        %p1019 = scmp.lt.s32.totalorder %s1016, 7
        %s1020 = scalar_select %p1019, %s1016, 7
        %s1021 = smul.addr %s1018, 8
        %s1022 = sadd.s32 %s1020, %s1021
        %s1023 = scalar_lea.vmem %s3, %s1022
      $region48: #{ohem_cross_entropy.2} parent=39 // pred_fallthru
        _
    $region40: #{ohem_cross_entropy.2} parent=5 // pred_fallthru
      _
  $region6: #{ohem_cross_entropy.2} parent=0 // loop_footer
    %s14 = sadd.s32 1, %s10
  $region7: #{ohem_cross_entropy.2} parent=0 // loop_footer_branch
    %9 = sbr.rel target = $region3
  $region8: #{ohem_cross_entropy.2} parent=0 // loop_exit
    _

// kernel: ohem_cross_entropy.3
$region0: #{ohem_cross_entropy.3}
  #allocation0 [shape = 'u32[]', space=smem, size = 0x4, offset = 0x4, fixed_abs, tag = 'smem constant byte address 0x4 - core index']
  #allocation1 [shape = 'u32[144,128]{1,0:T(1,128)}', space=vmem, size = 0x12000, scoped, tag = 'internal scratch']
  #allocation2 [shape = 'f32[1,2048]{1,0:T(1,128)}', space=vmem, size = 0x2000, scoped, tag = 'scratch operand']
  #allocation3 [shape = 'f32[1,2048]{1,0:T(1,128)}', space=vmem, size = 0x2000, scoped, tag = 'scratch operand']
  #allocation4 [shape = 'f32[1,1]{1,0:T(1,128)S(6)}', space=smem, size = 0x200, scoped, tag = 'scoped memory for ohem_cross_entropy.3']
  %s0 = inlined_call_operand.<no memory space> [shape: f32[1,1], index: 0, kind: input, shape index: {}]
  %s1 = inlined_call_operand.vmem [shape: f32[1,2048], index: 1, kind: input, shape index: {}]
  %s2 = inlined_call_operand.vmem [shape: f32[1,2048], index: 2, kind: input, shape index: {}]
  %s3 = inlined_call_operand.vmem [shape: f32[1,128], index: 3, kind: output, shape index: {0}]
  %s4 = inlined_call_operand.vmem [shape: f32[1,128], index: 4, kind: output, shape index: {1}]
  %5 = xla_tuple %s3, %s4
  %s6 = sld [smem:[#allocation0]]
  $region38: #{ohem_cross_entropy.3} parent=0
    _
  %s8 = ssub.s32 1, %s6
  %s9 = scalar_select 0, %s8, %s6
  %10 = sst [smem:[#allocation4]] %s0
  // Predicated region
  $region2: #{ohem_cross_entropy.3} parent=0 // pred_check
    _
  $region3: #{ohem_cross_entropy.3} parent=0 // pred_check_branch
    %12 = sbr.rel (0) target = $region5
  $region4: #{ohem_cross_entropy.3} parent=0 // pred_region
    _
  $region5: #{ohem_cross_entropy.3} parent=0 // pred_fallthru
    _
  // Predicated region
  $region6: #{ohem_cross_entropy.3} parent=0 // pred_check
    _
  $region7: #{ohem_cross_entropy.3} parent=0 // pred_check_branch
    %14 = sbr.rel (0) target = $region9
  $region8: #{ohem_cross_entropy.3} parent=0 // pred_region
    %s15 = sadd.s32 0, 0
    %p16 = scmp.lt.s32.totalorder %s15, 0
    %s17 = scalar_select %p16, %s15, 0
    %s18 = smul.u32 16, %s17
    %p19 = scmp.lt.s32.totalorder %s18, 15
    %s20 = scalar_select %p19, %s18, 15
    %s21 = scalar_lea.vmem %s1, %s20
    %s22 = sadd.s32 0, 0
    %p23 = scmp.lt.s32.totalorder %s22, 0
    %s24 = scalar_select %p23, %s22, 0
    %s25 = smul.u32 16, %s24
  $region9: #{ohem_cross_entropy.3} parent=0 // pred_fallthru
    _
  // Predicated region
  $region10: #{ohem_cross_entropy.3} parent=0 // pred_check
    _
  $region11: #{ohem_cross_entropy.3} parent=0 // pred_check_branch
    %27 = sbr.rel (0) target = $region13
  $region12: #{ohem_cross_entropy.3} parent=0 // pred_region
    %s28 = sadd.s32 0, 0
    %p29 = scmp.lt.s32.totalorder %s28, 0
    %s30 = scalar_select %p29, %s28, 0
    %s31 = smul.u32 16, %s30
    %p32 = scmp.lt.s32.totalorder %s31, 15
    %s33 = scalar_select %p32, %s31, 15
    %s34 = scalar_lea.vmem %s2, %s33
    %s35 = sadd.s32 0, 0
    %p36 = scmp.lt.s32.totalorder %s35, 0
    %s37 = scalar_select %p36, %s35, 0
    %s38 = smul.u32 16, %s37
  $region13: #{ohem_cross_entropy.3} parent=0 // pred_fallthru
    _
  %s39 = sadd.s32 0, 0
  %p40 = scmp.lt.s32.totalorder %s39, 0
  %s41 = scalar_select %p40, %s39, 0
  %s42 = smul.u32 16, %s41
  %p43 = scmp.lt.s32.totalorder %s42, 15
  %s44 = scalar_select %p43, %s42, 15
  %s45 = scalar_lea.vmem %s1, %s44
  %s46 = sadd.s32 0, 0
  %p47 = scmp.lt.s32.totalorder %s46, 0
  %s48 = scalar_select %p47, %s46, 0
  %s49 = smul.u32 16, %s48
  %p50 = scmp.lt.s32.totalorder %s49, 15
  %s51 = scalar_select %p50, %s49, 15
  %s52 = scalar_lea.vmem %s2, %s51
  %s53 = sadd.s32 0, 0
  %p54 = scmp.lt.s32.totalorder %s53, 0
  %s55 = scalar_select %p54, %s53, 0
  %s56 = smul.u32 16, %s55
  %p57 = scmp.lt.s32.totalorder %s56, 15
  %s58 = scalar_select %p57, %s56, 15
  %s59 = scalar_lea.vmem %s1, %s58
  %s60 = sadd.s32 0, 0
  %p61 = scmp.lt.s32.totalorder %s60, 0
  %s62 = scalar_select %p61, %s60, 0
  %s63 = smul.u32 16, %s62
  %s64 = sadd.s32 0, 0
  %p65 = scmp.lt.s32.totalorder %s64, 0
  %s66 = scalar_select %p65, %s64, 0
  %s67 = smul.u32 16, %s66
  %p68 = scmp.lt.s32.totalorder %s67, 15
  %s69 = scalar_select %p68, %s67, 15
  %s70 = scalar_lea.vmem %s2, %s69
  %s71 = sadd.s32 0, 0
  %p72 = scmp.lt.s32.totalorder %s71, 0
  %s73 = scalar_select %p72, %s71, 0
  %s74 = smul.u32 16, %s73
  %p75 = scmp.eq.s32.totalorder 0, 0
  // Predicated region
  $region14: #{ohem_cross_entropy.3} parent=0 // pred_check
    %p76 = pneg %p75
  $region15: #{ohem_cross_entropy.3} parent=0 // pred_check_branch
    %78 = sbr.rel (%p76) target = $region17
  $region16: #{ohem_cross_entropy.3} parent=0 // pred_region
    %79 = vst [vmem:[#allocation2] sm:$0xff] 0.0
    %80 = vst [vmem:[#allocation2 + $0x8] sm:$0xff] 0.0
    %81 = vst [vmem:[#allocation3] sm:$0xff] 0.0
    %82 = vst [vmem:[#allocation3 + $0x8] sm:$0xff] 0.0
  $region17: #{ohem_cross_entropy.3} parent=0 // pred_fallthru
    _
  %s83 = sadd.s32 0, 0
  %v84 = vlaneseq
  %v85 = vand.u32 %v84, 127
  %v86 = vadd.s32 %v85, 128
  %v87 = vadd.s32 %v85, 256
  %v88 = vadd.s32 %v85, 384
  %v89 = vadd.s32 %v85, 512
  %v90 = vadd.s32 %v85, 640
  %v91 = vadd.s32 %v85, 768
  %v92 = vadd.s32 %v85, 896
  %v93 = vadd.s32 %v85, 1024
  %v94 = vadd.s32 %v85, 1152
  %v95 = vadd.s32 %v85, 1280
  %v96 = vadd.s32 %v85, 1408
  %v97 = vadd.s32 %v85, 1536
  %v98 = vadd.s32 %v85, 1664
  %v99 = vadd.s32 %v85, 1792
  %v100 = vadd.s32 %v85, 1920
  %s101 = smul.u32 %s83, 2048
  %v102 = vstv %s101
  %v103 = vadd.s32 %v102, %v85
  %v104 = vadd.s32 %v102, %v86
  %v105 = vadd.s32 %v102, %v87
  %v106 = vadd.s32 %v102, %v88
  %v107 = vadd.s32 %v102, %v89
  %v108 = vadd.s32 %v102, %v90
  %v109 = vadd.s32 %v102, %v91
  %v110 = vadd.s32 %v102, %v92
  %v111 = vadd.s32 %v102, %v93
  %v112 = vadd.s32 %v102, %v94
  %v113 = vadd.s32 %v102, %v95
  %v114 = vadd.s32 %v102, %v96
  %v115 = vadd.s32 %v102, %v97
  %v116 = vadd.s32 %v102, %v98
  %v117 = vadd.s32 %v102, %v99
  %v118 = vadd.s32 %v102, %v100
  %vm119 = vcmp.lt.s32.totalorder %v103, 2048
  %vm120 = vcmp.lt.s32.totalorder %v104, 2048
  %vm121 = vcmp.lt.s32.totalorder %v105, 2048
  %vm122 = vcmp.lt.s32.totalorder %v106, 2048
  %vm123 = vcmp.lt.s32.totalorder %v107, 2048
  %vm124 = vcmp.lt.s32.totalorder %v108, 2048
  %vm125 = vcmp.lt.s32.totalorder %v109, 2048
  %vm126 = vcmp.lt.s32.totalorder %v110, 2048
  %vm127 = vcmp.lt.s32.totalorder %v111, 2048
  %vm128 = vcmp.lt.s32.totalorder %v112, 2048
  %vm129 = vcmp.lt.s32.totalorder %v113, 2048
  %vm130 = vcmp.lt.s32.totalorder %v114, 2048
  %vm131 = vcmp.lt.s32.totalorder %v115, 2048
  %vm132 = vcmp.lt.s32.totalorder %v116, 2048
  %vm133 = vcmp.lt.s32.totalorder %v117, 2048
  %vm134 = vcmp.lt.s32.totalorder %v118, 2048
  %v135 = vld [vmem:[%s70] sm:$0xff]
  %v136 = vld [vmem:[%s70 + $0x8] sm:$0xff]
  %s137 = sld [smem:[#allocation4]]
  %v138 = vstv %s137
  %vm139 = vcmp.lt.f32.partialorder %v135, %v138
  %vm140 = vcmp.lt.f32.partialorder %v136, %v138
  %v141 = vsel %vm139, 1, 0
  %v142 = vsel %vm140, 1, 0
  %v143 = vlaneseq
  %v144 = vshrl.u32 %v143, 7
  %v145 = vsub.s32 0, %v144
  %v146 = vrot.slane %v141, %v145
  %v147 = vlaneseq
  %v148 = vshrl.u32 %v147, 7
  %v149 = vsub.s32 1, %v148
  %v150 = vrot.slane %v141, %v149
  %v151 = vlaneseq
  %v152 = vshrl.u32 %v151, 7
  %v153 = vsub.s32 2, %v152
  %v154 = vrot.slane %v141, %v153
  %v155 = vlaneseq
  %v156 = vshrl.u32 %v155, 7
  %v157 = vsub.s32 3, %v156
  %v158 = vrot.slane %v141, %v157
  %v159 = vlaneseq
  %v160 = vshrl.u32 %v159, 7
  %v161 = vsub.s32 4, %v160
  %v162 = vrot.slane %v141, %v161
  %v163 = vlaneseq
  %v164 = vshrl.u32 %v163, 7
  %v165 = vsub.s32 5, %v164
  %v166 = vrot.slane %v141, %v165
  %v167 = vlaneseq
  %v168 = vshrl.u32 %v167, 7
  %v169 = vsub.s32 6, %v168
  %v170 = vrot.slane %v141, %v169
  %v171 = vlaneseq
  %v172 = vshrl.u32 %v171, 7
  %v173 = vsub.s32 7, %v172
  %v174 = vrot.slane %v141, %v173
  %v175 = vlaneseq
  %v176 = vshrl.u32 %v175, 7
  %v177 = vsub.s32 0, %v176
  %v178 = vrot.slane %v142, %v177
  %v179 = vlaneseq
  %v180 = vshrl.u32 %v179, 7
  %v181 = vsub.s32 1, %v180
  %v182 = vrot.slane %v142, %v181
  %v183 = vlaneseq
  %v184 = vshrl.u32 %v183, 7
  %v185 = vsub.s32 2, %v184
  %v186 = vrot.slane %v142, %v185
  %v187 = vlaneseq
  %v188 = vshrl.u32 %v187, 7
  %v189 = vsub.s32 3, %v188
  %v190 = vrot.slane %v142, %v189
  %v191 = vlaneseq
  %v192 = vshrl.u32 %v191, 7
  %v193 = vsub.s32 4, %v192
  %v194 = vrot.slane %v142, %v193
  %v195 = vlaneseq
  %v196 = vshrl.u32 %v195, 7
  %v197 = vsub.s32 5, %v196
  %v198 = vrot.slane %v142, %v197
  %v199 = vlaneseq
  %v200 = vshrl.u32 %v199, 7
  %v201 = vsub.s32 6, %v200
  %v202 = vrot.slane %v142, %v201
  %v203 = vlaneseq
  %v204 = vshrl.u32 %v203, 7
  %v205 = vsub.s32 7, %v204
  %v206 = vrot.slane %v142, %v205
  %vm207 = vcmp.ne.s32.totalorder %v146, 0
  %vm208 = vcmp.ne.s32.totalorder %v150, 0
  %vm209 = vcmp.ne.s32.totalorder %v154, 0
  %vm210 = vcmp.ne.s32.totalorder %v158, 0
  %vm211 = vcmp.ne.s32.totalorder %v162, 0
  %vm212 = vcmp.ne.s32.totalorder %v166, 0
  %vm213 = vcmp.ne.s32.totalorder %v170, 0
  %vm214 = vcmp.ne.s32.totalorder %v174, 0
  %vm215 = vcmp.ne.s32.totalorder %v178, 0
  %vm216 = vcmp.ne.s32.totalorder %v182, 0
  %vm217 = vcmp.ne.s32.totalorder %v186, 0
  %vm218 = vcmp.ne.s32.totalorder %v190, 0
  %vm219 = vcmp.ne.s32.totalorder %v194, 0
  %vm220 = vcmp.ne.s32.totalorder %v198, 0
  %vm221 = vcmp.ne.s32.totalorder %v202, 0
  %vm222 = vcmp.ne.s32.totalorder %v206, 0
  %vm223 = vmand %vm119, %vm207
  %vm224 = vmand %vm120, %vm208
  %vm225 = vmand %vm121, %vm209
  %vm226 = vmand %vm122, %vm210
  %vm227 = vmand %vm123, %vm211
  %vm228 = vmand %vm124, %vm212
  %vm229 = vmand %vm125, %vm213
  %vm230 = vmand %vm126, %vm214
  %vm231 = vmand %vm127, %vm215
  %vm232 = vmand %vm128, %vm216
  %vm233 = vmand %vm129, %vm217
  %vm234 = vmand %vm130, %vm218
  %vm235 = vmand %vm131, %vm219
  %vm236 = vmand %vm132, %vm220
  %vm237 = vmand %vm133, %vm221
  %vm238 = vmand %vm134, %vm222
  %v239 = vld [vmem:[#allocation2] sm:$0xff]
  %v240 = vld [vmem:[#allocation2 + $0x8] sm:$0xff]
  %v241 = vld [vmem:[%s59] sm:$0xff]
  %v242 = vld [vmem:[%s59 + $0x8] sm:$0xff]
  %v245 = vlaneseq
  %v246 = vshrl.u32 %v245, 7
  %v247 = vsub.s32 0, %v246
  %v248 = vrot.slane %v241, %v247
  %v249 = vlaneseq
  %v250 = vshrl.u32 %v249, 7
  %v251 = vsub.s32 1, %v250
  %v252 = vrot.slane %v241, %v251
  %v253 = vlaneseq
  %v254 = vshrl.u32 %v253, 7
  %v255 = vsub.s32 2, %v254
  %v256 = vrot.slane %v241, %v255
  %v257 = vlaneseq
  %v258 = vshrl.u32 %v257, 7
  %v259 = vsub.s32 3, %v258
  %v260 = vrot.slane %v241, %v259
  %v261 = vlaneseq
  %v262 = vshrl.u32 %v261, 7
  %v263 = vsub.s32 4, %v262
  %v264 = vrot.slane %v241, %v263
  %v265 = vlaneseq
  %v266 = vshrl.u32 %v265, 7
  %v267 = vsub.s32 5, %v266
  %v268 = vrot.slane %v241, %v267
  %v269 = vlaneseq
  %v270 = vshrl.u32 %v269, 7
  %v271 = vsub.s32 6, %v270
  %v272 = vrot.slane %v241, %v271
  %v273 = vlaneseq
  %v274 = vshrl.u32 %v273, 7
  %v275 = vsub.s32 7, %v274
  %v276 = vrot.slane %v241, %v275
  %v277 = vlaneseq
  %v278 = vshrl.u32 %v277, 7
  %v279 = vsub.s32 0, %v278
  %v280 = vrot.slane %v242, %v279
  %v281 = vlaneseq
  %v282 = vshrl.u32 %v281, 7
  %v283 = vsub.s32 1, %v282
  %v284 = vrot.slane %v242, %v283
  %v285 = vlaneseq
  %v286 = vshrl.u32 %v285, 7
  %v287 = vsub.s32 2, %v286
  %v288 = vrot.slane %v242, %v287
  %v289 = vlaneseq
  %v290 = vshrl.u32 %v289, 7
  %v291 = vsub.s32 3, %v290
  %v292 = vrot.slane %v242, %v291
  %v293 = vlaneseq
  %v294 = vshrl.u32 %v293, 7
  %v295 = vsub.s32 4, %v294
  %v296 = vrot.slane %v242, %v295
  %v297 = vlaneseq
  %v298 = vshrl.u32 %v297, 7
  %v299 = vsub.s32 5, %v298
  %v300 = vrot.slane %v242, %v299
  %v301 = vlaneseq
  %v302 = vshrl.u32 %v301, 7
  %v303 = vsub.s32 6, %v302
  %v304 = vrot.slane %v242, %v303
  %v305 = vlaneseq
  %v306 = vshrl.u32 %v305, 7
  %v307 = vsub.s32 7, %v306
  %v308 = vrot.slane %v242, %v307
  %v325 = vsel %vm223, %v248, 0.0
  %v326 = vsel %vm224, %v252, 0.0
  %v327 = vsel %vm225, %v256, 0.0
  %v328 = vsel %vm226, %v260, 0.0
  %v329 = vsel %vm227, %v264, 0.0
  %v330 = vsel %vm228, %v268, 0.0
  %v331 = vsel %vm229, %v272, 0.0
  %v332 = vsel %vm230, %v276, 0.0
  %v333 = vsel %vm231, %v280, 0.0
  %v334 = vsel %vm232, %v284, 0.0
  %v335 = vsel %vm233, %v288, 0.0
  %v336 = vsel %vm234, %v292, 0.0
  %v337 = vsel %vm235, %v296, 0.0
  %v338 = vsel %vm236, %v300, 0.0
  %v339 = vsel %vm237, %v304, 0.0
  %v340 = vsel %vm238, %v308, 0.0
  %v357 = vcombine.low %v325, %v326
  %v358 = vcombine.low %v327, %v328
  %v359 = vcombine.low %v329, %v330
  %v360 = vcombine.low %v331, %v332
  %v362 = vunpack.c.l.s4 1966171168
  %v363 = vunpack.c.0.s8 %v362
  %v364 = vlaneseq
  %v365 = vshrl.u32 %v364, 7
  %v366 = vsub.s32 %v363, %v365
  %v367 = vrot.slane %v357, %v366
  %v369 = vunpack.c.l.s4 1966171168
  %v370 = vunpack.c.0.s8 %v369
  %v371 = vlaneseq
  %v372 = vshrl.u32 %v371, 7
  %v373 = vsub.s32 %v370, %v372
  %v374 = vrot.slane %v358, %v373
  %v376 = vunpack.c.l.s4 1966171168
  %v377 = vunpack.c.0.s8 %v376
  %v378 = vlaneseq
  %v379 = vshrl.u32 %v378, 7
  %v380 = vsub.s32 %v377, %v379
  %v381 = vrot.slane %v359, %v380
  %v383 = vunpack.c.l.s4 1966171168
  %v384 = vunpack.c.0.s8 %v383
  %v385 = vlaneseq
  %v386 = vshrl.u32 %v385, 7
  %v387 = vsub.s32 %v384, %v386
  %v388 = vrot.slane %v360, %v387
  %v389 = vcombine.low %v367, %v374
  %v390 = vcombine.low %v381, %v388
  %v392 = vunpack.c.l.s4 1966171168
  %v393 = vunpack.c.0.s8 %v392
  %v394 = vlaneseq
  %v395 = vshrl.u32 %v394, 7
  %v396 = vsub.s32 %v393, %v395
  %v397 = vrot.slane %v389, %v396
  %v399 = vunpack.c.l.s4 1966171168
  %v400 = vunpack.c.0.s8 %v399
  %v401 = vlaneseq
  %v402 = vshrl.u32 %v401, 7
  %v403 = vsub.s32 %v400, %v402
  %v404 = vrot.slane %v390, %v403
  %v405 = vcombine.low %v397, %v404
  %v406 = vcombine.low %v333, %v334
  %v407 = vcombine.low %v335, %v336
  %v408 = vcombine.low %v337, %v338
  %v409 = vcombine.low %v339, %v340
  %v411 = vunpack.c.l.s4 1966171168
  %v412 = vunpack.c.0.s8 %v411
  %v413 = vlaneseq
  %v414 = vshrl.u32 %v413, 7
  %v415 = vsub.s32 %v412, %v414
  %v416 = vrot.slane %v406, %v415
  %v418 = vunpack.c.l.s4 1966171168
  %v419 = vunpack.c.0.s8 %v418
  %v420 = vlaneseq
  %v421 = vshrl.u32 %v420, 7
  %v422 = vsub.s32 %v419, %v421
  %v423 = vrot.slane %v407, %v422
  %v425 = vunpack.c.l.s4 1966171168
  %v426 = vunpack.c.0.s8 %v425
  %v427 = vlaneseq
  %v428 = vshrl.u32 %v427, 7
  %v429 = vsub.s32 %v426, %v428
  %v430 = vrot.slane %v408, %v429
  %v432 = vunpack.c.l.s4 1966171168
  %v433 = vunpack.c.0.s8 %v432
  %v434 = vlaneseq
  %v435 = vshrl.u32 %v434, 7
  %v436 = vsub.s32 %v433, %v435
  %v437 = vrot.slane %v409, %v436
  %v438 = vcombine.low %v416, %v423
  %v439 = vcombine.low %v430, %v437
  %v441 = vunpack.c.l.s4 1966171168
  %v442 = vunpack.c.0.s8 %v441
  %v443 = vlaneseq
  %v444 = vshrl.u32 %v443, 7
  %v445 = vsub.s32 %v442, %v444
  %v446 = vrot.slane %v438, %v445
  %v448 = vunpack.c.l.s4 1966171168
  %v449 = vunpack.c.0.s8 %v448
  %v450 = vlaneseq
  %v451 = vshrl.u32 %v450, 7
  %v452 = vsub.s32 %v449, %v451
  %v453 = vrot.slane %v439, %v452
  %v454 = vcombine.low %v446, %v453
  %v457 = vadd.f32 %v239, %v405
  %v458 = vadd.f32 %v240, %v454
  %459 = vst [vmem:[#allocation2] sm:$0xff] %v457
  %460 = vst [vmem:[#allocation2 + $0x8] sm:$0xff] %v458
  %v461 = vld [vmem:[#allocation3] sm:$0xff]
  %v462 = vld [vmem:[#allocation3 + $0x8] sm:$0xff]
  %v463 = vsel %vm223, 1.0, 0.0
  %v464 = vsel %vm224, 1.0, 0.0
  %v465 = vsel %vm225, 1.0, 0.0
  %v466 = vsel %vm226, 1.0, 0.0
  %v467 = vsel %vm227, 1.0, 0.0
  %v468 = vsel %vm228, 1.0, 0.0
  %v469 = vsel %vm229, 1.0, 0.0
  %v470 = vsel %vm230, 1.0, 0.0
  %v471 = vsel %vm231, 1.0, 0.0
  %v472 = vsel %vm232, 1.0, 0.0
  %v473 = vsel %vm233, 1.0, 0.0
  %v474 = vsel %vm234, 1.0, 0.0
  %v475 = vsel %vm235, 1.0, 0.0
  %v476 = vsel %vm236, 1.0, 0.0
  %v477 = vsel %vm237, 1.0, 0.0
  %v478 = vsel %vm238, 1.0, 0.0
  %v495 = vcombine.low %v463, %v464
  %v496 = vcombine.low %v465, %v466
  %v497 = vcombine.low %v467, %v468
  %v498 = vcombine.low %v469, %v470
  %v500 = vunpack.c.l.s4 1966171168
  %v501 = vunpack.c.0.s8 %v500
  %v502 = vlaneseq
  %v503 = vshrl.u32 %v502, 7
  %v504 = vsub.s32 %v501, %v503
  %v505 = vrot.slane %v495, %v504
  %v507 = vunpack.c.l.s4 1966171168
  %v508 = vunpack.c.0.s8 %v507
  %v509 = vlaneseq
  %v510 = vshrl.u32 %v509, 7
  %v511 = vsub.s32 %v508, %v510
  %v512 = vrot.slane %v496, %v511
  %v514 = vunpack.c.l.s4 1966171168
  %v515 = vunpack.c.0.s8 %v514
  %v516 = vlaneseq
  %v517 = vshrl.u32 %v516, 7
  %v518 = vsub.s32 %v515, %v517
  %v519 = vrot.slane %v497, %v518
  %v521 = vunpack.c.l.s4 1966171168
  %v522 = vunpack.c.0.s8 %v521
  %v523 = vlaneseq
  %v524 = vshrl.u32 %v523, 7
  %v525 = vsub.s32 %v522, %v524
  %v526 = vrot.slane %v498, %v525
  %v527 = vcombine.low %v505, %v512
  %v528 = vcombine.low %v519, %v526
  %v530 = vunpack.c.l.s4 1966171168
  %v531 = vunpack.c.0.s8 %v530
  %v532 = vlaneseq
  %v533 = vshrl.u32 %v532, 7
  %v534 = vsub.s32 %v531, %v533
  %v535 = vrot.slane %v527, %v534
  %v537 = vunpack.c.l.s4 1966171168
  %v538 = vunpack.c.0.s8 %v537
  %v539 = vlaneseq
  %v540 = vshrl.u32 %v539, 7
  %v541 = vsub.s32 %v538, %v540
  %v542 = vrot.slane %v528, %v541
  %v543 = vcombine.low %v535, %v542
  %v544 = vcombine.low %v471, %v472
  %v545 = vcombine.low %v473, %v474
  %v546 = vcombine.low %v475, %v476
  %v547 = vcombine.low %v477, %v478
  %v549 = vunpack.c.l.s4 1966171168
  %v550 = vunpack.c.0.s8 %v549
  %v551 = vlaneseq
  %v552 = vshrl.u32 %v551, 7
  %v553 = vsub.s32 %v550, %v552
  %v554 = vrot.slane %v544, %v553
  %v556 = vunpack.c.l.s4 1966171168
  %v557 = vunpack.c.0.s8 %v556
  %v558 = vlaneseq
  %v559 = vshrl.u32 %v558, 7
  %v560 = vsub.s32 %v557, %v559
  %v561 = vrot.slane %v545, %v560
  %v563 = vunpack.c.l.s4 1966171168
  %v564 = vunpack.c.0.s8 %v563
  %v565 = vlaneseq
  %v566 = vshrl.u32 %v565, 7
  %v567 = vsub.s32 %v564, %v566
  %v568 = vrot.slane %v546, %v567
  %v570 = vunpack.c.l.s4 1966171168
  %v571 = vunpack.c.0.s8 %v570
  %v572 = vlaneseq
  %v573 = vshrl.u32 %v572, 7
  %v574 = vsub.s32 %v571, %v573
  %v575 = vrot.slane %v547, %v574
  %v576 = vcombine.low %v554, %v561
  %v577 = vcombine.low %v568, %v575
  %v579 = vunpack.c.l.s4 1966171168
  %v580 = vunpack.c.0.s8 %v579
  %v581 = vlaneseq
  %v582 = vshrl.u32 %v581, 7
  %v583 = vsub.s32 %v580, %v582
  %v584 = vrot.slane %v576, %v583
  %v586 = vunpack.c.l.s4 1966171168
  %v587 = vunpack.c.0.s8 %v586
  %v588 = vlaneseq
  %v589 = vshrl.u32 %v588, 7
  %v590 = vsub.s32 %v587, %v589
  %v591 = vrot.slane %v577, %v590
  %v592 = vcombine.low %v584, %v591
  %v595 = vadd.f32 %v461, %v543
  %v596 = vadd.f32 %v462, %v592
  %597 = vst [vmem:[#allocation3] sm:$0xff] %v595
  %598 = vst [vmem:[#allocation3 + $0x8] sm:$0xff] %v596
  // Predicated region
  $region18: #{ohem_cross_entropy.3} parent=0 // pred_check
    %p599 = pneg %p75
  $region19: #{ohem_cross_entropy.3} parent=0 // pred_check_branch
    %601 = sbr.rel (%p599) target = $region21
  $region20: #{ohem_cross_entropy.3} parent=0 // pred_region
    %v602 = vld [vmem:[#allocation2] sm:$0xff]
    %v603 = vld [vmem:[#allocation2 + $0x8] sm:$0xff]
    %v606 = vlaneseq
    %v607 = vshrl.u32 %v606, 7
    %v608 = vsub.s32 0, %v607
    %v609 = vrot.slane %v602, %v608
    %v610 = vlaneseq
    %v611 = vshrl.u32 %v610, 7
    %v612 = vsub.s32 1, %v611
    %v613 = vrot.slane %v602, %v612
    %v614 = vlaneseq
    %v615 = vshrl.u32 %v614, 7
    %v616 = vsub.s32 2, %v615
    %v617 = vrot.slane %v602, %v616
    %v618 = vlaneseq
    %v619 = vshrl.u32 %v618, 7
    %v620 = vsub.s32 3, %v619
    %v621 = vrot.slane %v602, %v620
    %v622 = vlaneseq
    %v623 = vshrl.u32 %v622, 7
    %v624 = vsub.s32 4, %v623
    %v625 = vrot.slane %v602, %v624
    %v626 = vlaneseq
    %v627 = vshrl.u32 %v626, 7
    %v628 = vsub.s32 5, %v627
    %v629 = vrot.slane %v602, %v628
    %v630 = vlaneseq
    %v631 = vshrl.u32 %v630, 7
    %v632 = vsub.s32 6, %v631
    %v633 = vrot.slane %v602, %v632
    %v634 = vlaneseq
    %v635 = vshrl.u32 %v634, 7
    %v636 = vsub.s32 7, %v635
    %v637 = vrot.slane %v602, %v636
    %v638 = vlaneseq
    %v639 = vshrl.u32 %v638, 7
    %v640 = vsub.s32 0, %v639
    %v641 = vrot.slane %v603, %v640
    %v642 = vlaneseq
    %v643 = vshrl.u32 %v642, 7
    %v644 = vsub.s32 1, %v643
    %v645 = vrot.slane %v603, %v644
    %v646 = vlaneseq
    %v647 = vshrl.u32 %v646, 7
    %v648 = vsub.s32 2, %v647
    %v649 = vrot.slane %v603, %v648
    %v650 = vlaneseq
    %v651 = vshrl.u32 %v650, 7
    %v652 = vsub.s32 3, %v651
    %v653 = vrot.slane %v603, %v652
    %v654 = vlaneseq
    %v655 = vshrl.u32 %v654, 7
    %v656 = vsub.s32 4, %v655
    %v657 = vrot.slane %v603, %v656
    %v658 = vlaneseq
    %v659 = vshrl.u32 %v658, 7
    %v660 = vsub.s32 5, %v659
    %v661 = vrot.slane %v603, %v660
    %v662 = vlaneseq
    %v663 = vshrl.u32 %v662, 7
    %v664 = vsub.s32 6, %v663
    %v665 = vrot.slane %v603, %v664
    %v666 = vlaneseq
    %v667 = vshrl.u32 %v666, 7
    %v668 = vsub.s32 7, %v667
    %v669 = vrot.slane %v603, %v668
    %vm686 = vcmask 1040384
    %v687 = vsel %vm686, %v609, 0.0
    %v688 = vsel %vm686, %v613, 0.0
    %v689 = vadd.f32 %v687, %v688
    %v690 = vsel %vm686, %v617, 0.0
    %v691 = vadd.f32 %v689, %v690
    %v692 = vsel %vm686, %v621, 0.0
    %v693 = vadd.f32 %v691, %v692
    %v694 = vsel %vm686, %v625, 0.0
    %v695 = vadd.f32 %v693, %v694
    %v696 = vsel %vm686, %v629, 0.0
    %v697 = vadd.f32 %v695, %v696
    %v698 = vsel %vm686, %v633, 0.0
    %v699 = vadd.f32 %v697, %v698
    %v700 = vsel %vm686, %v637, 0.0
    %v701 = vadd.f32 %v699, %v700
    %v702 = vsel %vm686, %v641, 0.0
    %v703 = vadd.f32 %v701, %v702
    %v704 = vsel %vm686, %v645, 0.0
    %v705 = vadd.f32 %v703, %v704
    %v706 = vsel %vm686, %v649, 0.0
    %v707 = vadd.f32 %v705, %v706
    %v708 = vsel %vm686, %v653, 0.0
    %v709 = vadd.f32 %v707, %v708
    %v710 = vsel %vm686, %v657, 0.0
    %v711 = vadd.f32 %v709, %v710
    %v712 = vsel %vm686, %v661, 0.0
    %v713 = vadd.f32 %v711, %v712
    %v714 = vsel %vm686, %v665, 0.0
    %v715 = vadd.f32 %v713, %v714
    %v716 = vsel %vm686, %v669, 0.0
    %v717 = vadd.f32 %v715, %v716
    %718 = vadd.xlane.f32.xlu0 %v717
    %v719 = vpop.xlane.xlu0 %718
    %v720 = vld [vmem:[#allocation3] sm:$0xff]
    %v721 = vld [vmem:[#allocation3 + $0x8] sm:$0xff]
    %v724 = vlaneseq
    %v725 = vshrl.u32 %v724, 7
    %v726 = vsub.s32 0, %v725
    %v727 = vrot.slane %v720, %v726
    %v728 = vlaneseq
    %v729 = vshrl.u32 %v728, 7
    %v730 = vsub.s32 1, %v729
    %v731 = vrot.slane %v720, %v730
    %v732 = vlaneseq
    %v733 = vshrl.u32 %v732, 7
    %v734 = vsub.s32 2, %v733
    %v735 = vrot.slane %v720, %v734
    %v736 = vlaneseq
    %v737 = vshrl.u32 %v736, 7
    %v738 = vsub.s32 3, %v737
    %v739 = vrot.slane %v720, %v738
    %v740 = vlaneseq
    %v741 = vshrl.u32 %v740, 7
    %v742 = vsub.s32 4, %v741
    %v743 = vrot.slane %v720, %v742
    %v744 = vlaneseq
    %v745 = vshrl.u32 %v744, 7
    %v746 = vsub.s32 5, %v745
    %v747 = vrot.slane %v720, %v746
    %v748 = vlaneseq
    %v749 = vshrl.u32 %v748, 7
    %v750 = vsub.s32 6, %v749
    %v751 = vrot.slane %v720, %v750
    %v752 = vlaneseq
    %v753 = vshrl.u32 %v752, 7
    %v754 = vsub.s32 7, %v753
    %v755 = vrot.slane %v720, %v754
    %v756 = vlaneseq
    %v757 = vshrl.u32 %v756, 7
    %v758 = vsub.s32 0, %v757
    %v759 = vrot.slane %v721, %v758
    %v760 = vlaneseq
    %v761 = vshrl.u32 %v760, 7
    %v762 = vsub.s32 1, %v761
    %v763 = vrot.slane %v721, %v762
    %v764 = vlaneseq
    %v765 = vshrl.u32 %v764, 7
    %v766 = vsub.s32 2, %v765
    %v767 = vrot.slane %v721, %v766
    %v768 = vlaneseq
    %v769 = vshrl.u32 %v768, 7
    %v770 = vsub.s32 3, %v769
    %v771 = vrot.slane %v721, %v770
    %v772 = vlaneseq
    %v773 = vshrl.u32 %v772, 7
    %v774 = vsub.s32 4, %v773
    %v775 = vrot.slane %v721, %v774
    %v776 = vlaneseq
    %v777 = vshrl.u32 %v776, 7
    %v778 = vsub.s32 5, %v777
    %v779 = vrot.slane %v721, %v778
    %v780 = vlaneseq
    %v781 = vshrl.u32 %v780, 7
    %v782 = vsub.s32 6, %v781
    %v783 = vrot.slane %v721, %v782
    %v784 = vlaneseq
    %v785 = vshrl.u32 %v784, 7
    %v786 = vsub.s32 7, %v785
    %v787 = vrot.slane %v721, %v786
    %v804 = vsel %vm686, %v727, 0.0
    %v805 = vsel %vm686, %v731, 0.0
    %v806 = vadd.f32 %v804, %v805
    %v807 = vsel %vm686, %v735, 0.0
    %v808 = vadd.f32 %v806, %v807
    %v809 = vsel %vm686, %v739, 0.0
    %v810 = vadd.f32 %v808, %v809
    %v811 = vsel %vm686, %v743, 0.0
    %v812 = vadd.f32 %v810, %v811
    %v813 = vsel %vm686, %v747, 0.0
    %v814 = vadd.f32 %v812, %v813
    %v815 = vsel %vm686, %v751, 0.0
    %v816 = vadd.f32 %v814, %v815
    %v817 = vsel %vm686, %v755, 0.0
    %v818 = vadd.f32 %v816, %v817
    %v819 = vsel %vm686, %v759, 0.0
    %v820 = vadd.f32 %v818, %v819
    %v821 = vsel %vm686, %v763, 0.0
    %v822 = vadd.f32 %v820, %v821
    %v823 = vsel %vm686, %v767, 0.0
    %v824 = vadd.f32 %v822, %v823
    %v825 = vsel %vm686, %v771, 0.0
    %v826 = vadd.f32 %v824, %v825
    %v827 = vsel %vm686, %v775, 0.0
    %v828 = vadd.f32 %v826, %v827
    %v829 = vsel %vm686, %v779, 0.0
    %v830 = vadd.f32 %v828, %v829
    %v831 = vsel %vm686, %v783, 0.0
    %v832 = vadd.f32 %v830, %v831
    %v833 = vsel %vm686, %v787, 0.0
    %v834 = vadd.f32 %v832, %v833
    %835 = vadd.xlane.f32.xlu0 %v834
    %v836 = vpop.xlane.xlu0 %835
    %vm837 = vcmp.eq.s32.totalorder %v85, 0
    %v838 = vsel %vm837, %v719, 0.0
    %839 = vst [vmem:[%s3] sm:$0x1] %v838
    %v840 = vsel %vm837, %v836, 0.0
    %841 = vst [vmem:[%s4] sm:$0x1] %v840
  $region21: #{ohem_cross_entropy.3} parent=0 // pred_fallthru
    _
  // Predicated region
  $region22: #{ohem_cross_entropy.3} parent=0 // pred_check
    _
  $region23: #{ohem_cross_entropy.3} parent=0 // pred_check_branch
    %843 = sbr.rel (0) target = $region25
  $region24: #{ohem_cross_entropy.3} parent=0 // pred_region
    _
  $region25: #{ohem_cross_entropy.3} parent=0 // pred_fallthru
    _
  // Predicated region
  $region26: #{ohem_cross_entropy.3} parent=0 // pred_check
    _
  $region27: #{ohem_cross_entropy.3} parent=0 // pred_check_branch
    %845 = sbr.rel (0) target = $region29
  $region28: #{ohem_cross_entropy.3} parent=0 // pred_region
    _
  $region29: #{ohem_cross_entropy.3} parent=0 // pred_fallthru
    _
  // Predicated region
  $region30: #{ohem_cross_entropy.3} parent=0 // pred_check
    _
  $region31: #{ohem_cross_entropy.3} parent=0 // pred_check_branch
    %847 = sbr.rel (0) target = $region33
  $region32: #{ohem_cross_entropy.3} parent=0 // pred_region
    _
  $region33: #{ohem_cross_entropy.3} parent=0 // pred_fallthru
    _
  // Predicated region
  $region34: #{ohem_cross_entropy.3} parent=0 // pred_check
    _
  $region35: #{ohem_cross_entropy.3} parent=0 // pred_check_branch
    %849 = sbr.rel (0) target = $region37
  $region36: #{ohem_cross_entropy.3} parent=0 // pred_region
    _
  $region37: #{ohem_cross_entropy.3} parent=0 // pred_fallthru
    _

</llo_original>
